<compile_context>
chip_gen: v7x
topology: tpu7x:2x2x1
jax: 0.10.0
libtpu: 0.0.40
codegen_flags: <defaults>
</compile_context>

<pallas_src>
import functools

import jax
import jax.numpy as jnp
from jax.experimental import pallas as pl
from jax.experimental.pallas import tpu as pltpu

LN2D_EPS = 1e-6  # torch LayerNorm2d default in the reference module


# ----------------------------------------------------------------------------- kernel
def _layernorm2d_kernel(x_ref, g_ref, b_ref, o_ref, *, eps):
    """Channel LayerNorm on a (1, C, t_hw) NCHW tile: C on sublanes, H*W on lanes."""
    x = x_ref[...].astype(jnp.float32)                     # (1, C, t_hw)
    g = g_ref[...].astype(jnp.float32)                     # (1, C, 1)
    b = b_ref[...].astype(jnp.float32)                     # (1, C, 1)

    # Two-pass statistics over the channel (sublane) axis — tile is VMEM-resident,
    # so the second pass is free and avoids E[x^2] - mu^2 cancellation.
    mu = jnp.mean(x, axis=1, keepdims=True)                # (1, 1, t_hw)
    xc = x - mu
    var = jnp.mean(xc * xc, axis=1, keepdims=True)         # (1, 1, t_hw)

    scale = g * jax.lax.rsqrt(var + eps)                   # rsqrt -> EUP slot
    o_ref[...] = (xc * scale + b).astype(o_ref.dtype)


# ----------------------------------------------------------------------------- tiling
def _hw_tile(hw, c, itemsize, batch):
    """Lane-dim (H*W) tile: multiple of 128 (lane-dense stores), sized so the
    ~4 pipeline buffers (2 in + 2 out, double-buffered) stay under ~24 MiB on
    every TPU generation, no forced split for single-TC chips, and an even
    total grid-step count when the spatial axis does split (v7x megacore)."""
    if hw <= 128:
        return hw                                   # full dim: satisfies layout rule
    budget = 24 * 1024 * 1024
    per_lane = 4 * c * max(itemsize, 4)             # f32 worst case per lane column
    t_cap = max(128, budget // per_lane)
    t = min(hw, 2048, t_cap)
    t = max(128, (t // 128) * 128)
    steps = pl.cdiv(hw, t)
    if steps > 1 and (batch * steps) % 2 == 1:
        steps += 1                                  # even steps -> both v7x TCs busy
        t = max(128, ((pl.cdiv(hw, steps) + 127) // 128) * 128)
    return t


# ----------------------------------------------------------------------------- wrapper
def layernorm2d(x_nchw, gamma, beta, *, eps=LN2D_EPS):
    """LayerNorm2d forward: x (B, C, H, W), gamma/beta (C,) -> (B, C, H, W)."""
    B, C, H, W = x_nchw.shape
    HW = H * W

    x3 = x_nchw.reshape(B, C, HW)                   # free view: no HBM traffic

    t_hw = _hw_tile(HW, C, x_nchw.dtype.itemsize, B)
    n_hw = pl.cdiv(HW, t_hw)                        # partial last block is masked

    y3 = pl.pallas_call(
        functools.partial(_layernorm2d_kernel, eps=eps),
        out_shape=jax.ShapeDtypeStruct((B, C, HW), x_nchw.dtype),
        grid=(B, n_hw),
        in_specs=[
            pl.BlockSpec((1, C, t_hw), lambda b, j: (b, 0, j)),   # activations
            pl.BlockSpec((1, C, 1), lambda b, j: (0, 0, 0)),      # gamma (resident)
            pl.BlockSpec((1, C, 1), lambda b, j: (0, 0, 0)),      # beta  (resident)
        ],
        out_specs=pl.BlockSpec((1, C, t_hw), lambda b, j: (b, 0, j)),
        compiler_params=pltpu.CompilerParams(
            dimension_semantics=("parallel", "parallel"),
            vmem_limit_bytes=32 * 1024 * 1024,      # > tile budget, < v7x 64 MiB physical
        ),
    )(x3, gamma.reshape(1, C, 1), beta.reshape(1, C, 1))

    return y3.reshape(B, C, H, W)


# ----------------------------------------------------------------------------- reference
def layernorm2d_ref(x, gamma, beta, eps=LN2D_EPS):
    u = jnp.mean(x, axis=1, keepdims=True)
    s = jnp.mean((x - u) ** 2, axis=1, keepdims=True)
    xn = (x - u) / jnp.sqrt(s + eps)
    return gamma[None, :, None, None] * xn + beta[None, :, None, None]


# ----------------------------------------------------------------------------- main
if __name__ == "__main__":
    key = jax.random.PRNGKey(0)
    kx, kg, kb, kx2 = jax.random.split(key, 4)

    # Case 1: typical conv-feature-map shape; H*W = 256 keeps loads/stores lane-dense.
    B, C, H, W = 2, 384, 16, 16
    x = jax.random.normal(kx, (B, C, H, W), jnp.float32)
    gamma = 1.0 + 0.1 * jax.random.normal(kg, (C,), jnp.float32)
    beta = 0.1 * jax.random.normal(kb, (C,), jnp.float32)

    y = jax.block_until_ready(layernorm2d(x, gamma, beta))
    assert y.shape == x.shape and y.dtype == x.dtype
    assert bool(jnp.all(jnp.isfinite(y)))
    y_ref = layernorm2d_ref(x, gamma, beta)
    assert bool(jnp.allclose(y, y_ref, atol=1e-4, rtol=1e-4)), \
        float(jnp.max(jnp.abs(y - y_ref)))

    # Case 2: tiny channel count (not a multiple of 8) and odd spatial size
    # (H*W = 195, not a multiple of 128) -> exercises the masked partial lane
    # block and the sub-sublane-tile channel reduction.
    B2, C2, H2, W2 = 2, 4, 15, 13
    x2 = jax.random.normal(kx2, (B2, C2, H2, W2), jnp.float32)
    g2 = jnp.ones((C2,), jnp.float32)
    b2 = jnp.zeros((C2,), jnp.float32)

    y2 = jax.block_until_ready(layernorm2d(x2, g2, b2))
    assert y2.shape == x2.shape
    assert bool(jnp.all(jnp.isfinite(y2)))
    y2_ref = layernorm2d_ref(x2, g2, b2)
    assert bool(jnp.allclose(y2, y2_ref, atol=1e-4, rtol=1e-4)), \
        float(jnp.max(jnp.abs(y2 - y2_ref)))

    print("KERNEL_OK")
</pallas_src>

<mosaic_0001>
module attributes {stable_mosaic.version = 11 : i64} {
  func.func @_layernorm2d_kernel(%arg0: i32, %arg1: i32, %arg2: memref<1x384x256xf32, #tpu.memory_space<vmem>>, %arg3: memref<1x384x1xf32, #tpu.memory_space<vmem>>, %arg4: memref<1x384x1xf32, #tpu.memory_space<vmem>>, %arg5: memref<1x384x256xf32, #tpu.memory_space<vmem>>) attributes {dimension_semantics = [#tpu.dimension_semantics<parallel>, #tpu.dimension_semantics<parallel>], iteration_bounds = array<i64: 2, 1>, scalar_prefetch = 0 : i64, scratch_operands = 0 : i64, tpu.core_type = #tpu.core_type<tc>, window_params = [{transform_indices = @transform_0, window_bounds = array<i64: 1, 384, 256>}, {pipeline_mode = #tpu.pipeline_mode<synchronous>, transform_indices = @transform_1, window_bounds = array<i64: 1, 384, 1>}, {pipeline_mode = #tpu.pipeline_mode<synchronous>, transform_indices = @transform_2, window_bounds = array<i64: 1, 384, 1>}, {transform_indices = @transform_3, window_bounds = array<i64: 1, 384, 256>}]} {
    %c0 = arith.constant 0 : index
    %c0_0 = arith.constant 0 : index
    %c0_1 = arith.constant 0 : index
    %0 = vector.load %arg2[%c0, %c0_0, %c0_1] : memref<1x384x256xf32, #tpu.memory_space<vmem>>, vector<1x384x256xf32>
    %c0_2 = arith.constant 0 : index
    %c0_3 = arith.constant 0 : index
    %c0_4 = arith.constant 0 : index
    %1 = vector.load %arg3[%c0_2, %c0_3, %c0_4] : memref<1x384x1xf32, #tpu.memory_space<vmem>>, vector<1x384x1xf32>
    %c0_5 = arith.constant 0 : index
    %c0_6 = arith.constant 0 : index
    %c0_7 = arith.constant 0 : index
    %2 = vector.load %arg4[%c0_5, %c0_6, %c0_7] : memref<1x384x1xf32, #tpu.memory_space<vmem>>, vector<1x384x1xf32>
    %cst = arith.constant dense<0.000000e+00> : vector<1x256xf32>
    %3 = vector.multi_reduction <add>, %0, %cst [1] : vector<1x384x256xf32> to vector<1x256xf32>
    %4 = vector.shape_cast %3 : vector<1x256xf32> to vector<1x1x256xf32>
    %cst_8 = arith.constant 3.840000e+02 : f32
    %5 = vector.broadcast %cst_8 : f32 to vector<1x1x256xf32>
    %6 = arith.divf %4, %5 : vector<1x1x256xf32>
    %7 = vector.broadcast %6 : vector<1x1x256xf32> to vector<1x384x256xf32>
    %8 = arith.subf %0, %7 : vector<1x384x256xf32>
    %9 = arith.mulf %8, %8 : vector<1x384x256xf32>
    %cst_9 = arith.constant dense<0.000000e+00> : vector<1x256xf32>
    %10 = vector.multi_reduction <add>, %9, %cst_9 [1] : vector<1x384x256xf32> to vector<1x256xf32>
    %11 = vector.shape_cast %10 : vector<1x256xf32> to vector<1x1x256xf32>
    %cst_10 = arith.constant 3.840000e+02 : f32
    %12 = vector.broadcast %cst_10 : f32 to vector<1x1x256xf32>
    %13 = arith.divf %11, %12 : vector<1x1x256xf32>
    %cst_11 = arith.constant 9.99999997E-7 : f32
    %14 = vector.broadcast %cst_11 : f32 to vector<1x1x256xf32>
    %15 = arith.addf %13, %14 : vector<1x1x256xf32>
    %16 = math.rsqrt %15 : vector<1x1x256xf32>
    %17 = vector.broadcast %1 : vector<1x384x1xf32> to vector<1x384x256xf32>
    %18 = vector.broadcast %16 : vector<1x1x256xf32> to vector<1x384x256xf32>
    %19 = arith.mulf %17, %18 : vector<1x384x256xf32>
    %20 = arith.mulf %8, %19 : vector<1x384x256xf32>
    %21 = vector.broadcast %2 : vector<1x384x1xf32> to vector<1x384x256xf32>
    %22 = arith.addf %20, %21 : vector<1x384x256xf32>
    %c0_12 = arith.constant 0 : index
    %c0_13 = arith.constant 0 : index
    %c0_14 = arith.constant 0 : index
    %23 = vector.load %arg5[%c0_12, %c0_13, %c0_14] : memref<1x384x256xf32, #tpu.memory_space<vmem>>, vector<1x384x256xf32>
    tpu.vector_store %arg5[%c0_12, %c0_13, %c0_14], %22 {strides = array<i32>} : memref<1x384x256xf32, #tpu.memory_space<vmem>>, vector<1x384x256xf32>,
    return
  }
  func.func @transform_0(%arg0: i32, %arg1: i32) -> (i32, i32, i32) {
    %c0_i32 = arith.constant 0 : i32
    %c0_i32_0 = arith.constant 0 : i32
    return %arg0, %c0_i32, %arg1 : i32, i32, i32
  }
  func.func @transform_1(%arg0: i32, %arg1: i32) -> (i32, i32, i32) {
    %c0_i32 = arith.constant 0 : i32
    %c0_i32_0 = arith.constant 0 : i32
    %c0_i32_1 = arith.constant 0 : i32
    %c0_i32_2 = arith.constant 0 : i32
    return %c0_i32, %c0_i32_0, %c0_i32_1 : i32, i32, i32
  }
  func.func @transform_2(%arg0: i32, %arg1: i32) -> (i32, i32, i32) {
    %c0_i32 = arith.constant 0 : i32
    %c0_i32_0 = arith.constant 0 : i32
    %c0_i32_1 = arith.constant 0 : i32
    %c0_i32_2 = arith.constant 0 : i32
    return %c0_i32, %c0_i32_0, %c0_i32_1 : i32, i32, i32
  }
  func.func @transform_3(%arg0: i32, %arg1: i32) -> (i32, i32, i32) {
    %c0_i32 = arith.constant 0 : i32
    %c0_i32_0 = arith.constant 0 : i32
    return %arg0, %c0_i32, %arg1 : i32, i32, i32
  }
}

</mosaic_0001>

<llo_original>
// kernel: tpu_custom_call.1
$region0: #{tpu_custom_call.1}
  #allocation0 [shape = 'u32[]', space=smem, size = 0x4, offset = 0x4, fixed_abs, tag = 'smem constant byte address 0x4 - core index']
  #allocation1 [shape = 'u32[144,128]{1,0:T(1,128)}', space=vmem, size = 0x12000, scoped, tag = 'internal scratch']
  %s0 = inlined_call_operand.hbm [shape: f32[2,384,256], index: 0, kind: input, shape index: {}]
  %s1 = inlined_call_operand.vmem [shape: f32[1,384,1], index: 1, kind: input, shape index: {}]
  %s2 = inlined_call_operand.vmem [shape: f32[1,384,1], index: 2, kind: input, shape index: {}]
  %s3 = inlined_call_operand.hbm [shape: f32[2,384,256], index: 3, kind: output, shape index: {}]
  %s4 = sld [smem:[#allocation0]]
  $region49: #{tpu_custom_call.1} parent=0
    _
  %s6 = ssub.s32 1, %s4
  %s7 = scalar_select 0, %s6, %s4
  $region1: #{tpu_custom_call.1} parent=0
    #allocation2 [shape = 'u8[786432]{0}', space=vmem, size = 0xc0000, scoped, tag = 'input window, operand 0']
    #allocation3 [shape = 's32[2]{0}', space=sflag, size = 0x8, scoped, tag = 'scoped memory for tpu_custom_call.1']
    #allocation4 [shape = 's32[2]{0}', space=sflag, size = 0x8, scoped, tag = 'scoped memory for tpu_custom_call.1']
    #allocation5 [shape = 'u8[786432]{0}', space=vmem, size = 0xc0000, scoped, tag = 'output window, operand 0']
    %8 = vsyncpa [#allocation3], 0
    %s9 = scalar_lea.sflag [#allocation3], 1
    %10 = vsyncpa %s9, 0
    %11 = vsyncpa [#allocation4], 0
    %s12 = scalar_lea.sflag [#allocation4], 1
    %13 = vsyncpa %s12, 0
    loop: start=0, step=1, limit=4
    $region2: #{tpu_custom_call.1} parent=1 // loop_pre_header
      _
    $region3: #{tpu_custom_call.1} parent=1 // loop_header
      %s15 = sphi 0, %s19
      %p16 = scmp.ge.s32.totalorder %s15, 4
      %s22 = sphi 0, %s34
      %s23 = sphi 0, %s30
      %s24 = sphi 0, %s22
      %s25 = sphi 0, %s23
      %s26 = sphi 0, %s24
      %s27 = sphi 0, %s25
      %s39 = sphi 0, %s41
      %s42 = sphi 0, %s39
      %s43 = sphi 0, %s42
      %s59 = sphi 0, %s43
      %s63 = sphi 0, %s63
      %s65 = sphi 0, %s63
      %s66 = sphi 0, %s65
      %s80 = sphi 0, %s66
      %s84 = sphi 0, %s84
      %s86 = sphi 0, %s84
      %s87 = sphi 0, %s86
      %s101 = sphi 0, %s87
      %s109 = sphi 0, %s111
      %s112 = sphi 0, %s109
      %s113 = sphi 0, %s112
      %s129 = sphi 0, %s113
    $region4: #{tpu_custom_call.1} parent=1 // loop_header_branch
      %18 = sbr.rel (%p16) target = $region8
    $region5: #{tpu_custom_call.1} parent=1 // loop_body
      %s20 = ssub.s32 %s15, 1
      %s21 = ssub.s32 %s15, 2
      %s28 = sadd.s32 1, %s23
      %p29 = scmp.ge.s32.totalorder %s28, 1
      %s30 = scalar_select %p29, 0, %s28
      %s31 = sadd.s32 1, %s22
      %s32 = scalar_select %p29, %s31, %s22
      %p33 = scmp.ge.s32.totalorder %s32, 2
      %s34 = scalar_select %p33, 0, %s32
      %s35 = ssub.s32 %s22, %s34
      %s36 = ssub.s32 %s23, %s30
      %s37 = sor.u32 %s35, %s36
      %p38 = scmp.eq.s32.totalorder %s37, 0
      %s40 = sadd.s32 %s39, 1
      %s41 = scalar_select %p38, %s39, %s40
      %p44 = pneg %p38
      %p45 = scmp.eq.s32.totalorder %s15, 1
      %p46 = por %p44, %p45
      %p47 = scmp.ne.s32.totalorder %s39, %s42
      %p48 = scmp.eq.s32.totalorder %s15, 0
      %p49 = por %p47, %p48
      %p50 = scmp.ne.s32.totalorder %s39, %s42
      %p51 = scmp.eq.s32.totalorder %s20, 1
      %p52 = por %p50, %p51
      %p53 = scmp.ne.s32.totalorder %s42, %s43
      %p54 = scmp.eq.s32.totalorder %s20, 0
      %p55 = por %p53, %p54
      %p56 = scmp.ne.s32.totalorder %s42, %s43
      %p57 = scmp.eq.s32.totalorder %s21, 1
      %p58 = por %p56, %p57
      %p60 = scmp.ne.s32.totalorder %s43, %s59
      %p61 = scmp.eq.s32.totalorder %s21, 0
      %p62 = por %p60, %p61
      %s64 = sadd.s32 %s63, 1
      %p67 = scmp.eq.s32.totalorder %s15, 1
      %p68 = scmp.ne.s32.totalorder %s63, %s65
      %p69 = scmp.eq.s32.totalorder %s15, 0
      %p70 = por %p68, %p69
      %p71 = scmp.ne.s32.totalorder %s63, %s65
      %p72 = scmp.eq.s32.totalorder %s20, 1
      %p73 = por %p71, %p72
      %p74 = scmp.ne.s32.totalorder %s65, %s66
      %p75 = scmp.eq.s32.totalorder %s20, 0
      %p76 = por %p74, %p75
      %p77 = scmp.ne.s32.totalorder %s65, %s66
      %p78 = scmp.eq.s32.totalorder %s21, 1
      %p79 = por %p77, %p78
      %p81 = scmp.ne.s32.totalorder %s66, %s80
      %p82 = scmp.eq.s32.totalorder %s21, 0
      %p83 = por %p81, %p82
      %s85 = sadd.s32 %s84, 1
      %p88 = scmp.eq.s32.totalorder %s15, 1
      %p89 = scmp.ne.s32.totalorder %s84, %s86
      %p90 = scmp.eq.s32.totalorder %s15, 0
      %p91 = por %p89, %p90
      %p92 = scmp.ne.s32.totalorder %s84, %s86
      %p93 = scmp.eq.s32.totalorder %s20, 1
      %p94 = por %p92, %p93
      %p95 = scmp.ne.s32.totalorder %s86, %s87
      %p96 = scmp.eq.s32.totalorder %s20, 0
      %p97 = por %p95, %p96
      %p98 = scmp.ne.s32.totalorder %s86, %s87
      %p99 = scmp.eq.s32.totalorder %s21, 1
      %p100 = por %p98, %p99
      %p102 = scmp.ne.s32.totalorder %s87, %s101
      %p103 = scmp.eq.s32.totalorder %s21, 0
      %p104 = por %p102, %p103
      %s105 = ssub.s32 %s22, %s34
      %s106 = ssub.s32 %s23, %s30
      %s107 = sor.u32 %s105, %s106
      %p108 = scmp.eq.s32.totalorder %s107, 0
      %s110 = sadd.s32 %s109, 1
      %s111 = scalar_select %p108, %s109, %s110
      %p114 = pneg %p108
      %p115 = scmp.eq.s32.totalorder %s15, 1
      %p116 = por %p114, %p115
      %p117 = scmp.ne.s32.totalorder %s109, %s112
      %p118 = scmp.eq.s32.totalorder %s15, 0
      %p119 = por %p117, %p118
      %p120 = scmp.ne.s32.totalorder %s109, %s112
      %p121 = scmp.eq.s32.totalorder %s20, 1
      %p122 = por %p120, %p121
      %p123 = scmp.ne.s32.totalorder %s112, %s113
      %p124 = scmp.eq.s32.totalorder %s20, 0
      %p125 = por %p123, %p124
      %p126 = scmp.ne.s32.totalorder %s112, %s113
      %p127 = scmp.eq.s32.totalorder %s21, 1
      %p128 = por %p126, %p127
      %p130 = scmp.ne.s32.totalorder %s113, %s129
      %p131 = scmp.eq.s32.totalorder %s21, 0
      %p132 = por %p130, %p131
      %p133 = scmp.le.s32.totalorder 1, %s15
      %p134 = scmp.lt.s32.totalorder %s15, 3
      %p135 = pnand %p133, %p134
      %p136 = pneg %p135
      // Predicated region
      $region9: #{tpu_custom_call.1} parent=5 // pred_check
        _
      $region10: #{tpu_custom_call.1} parent=5 // pred_check_branch
        %138 = sbr.rel (%p135) target = $region12
      $region11: #{tpu_custom_call.1} parent=5 // pred_region
        %s139 = ssub.s32 %s15, 1
        // Predicated region
        $region13: #{tpu_custom_call.1} parent=11 // pred_check
          %p140 = pneg %p76
        $region14: #{tpu_custom_call.1} parent=11 // pred_check_branch
          %142 = sbr.rel (%p140) target = $region16
        $region15: #{tpu_custom_call.1} parent=11 // pred_region
          _
        $region16: #{tpu_custom_call.1} parent=11 // pred_fallthru
          _
        // Predicated region
        $region17: #{tpu_custom_call.1} parent=11 // pred_check
          %p143 = pneg %p97
        $region18: #{tpu_custom_call.1} parent=11 // pred_check_branch
          %145 = sbr.rel (%p143) target = $region20
        $region19: #{tpu_custom_call.1} parent=11 // pred_region
          _
        $region20: #{tpu_custom_call.1} parent=11 // pred_fallthru
          _
      $region12: #{tpu_custom_call.1} parent=5 // pred_fallthru
        _
      %p146 = scmp.lt.s32.totalorder %s15, 2
      // Predicated region
      $region21: #{tpu_custom_call.1} parent=5 // pred_check
        %p147 = pneg %p146
      $region22: #{tpu_custom_call.1} parent=5 // pred_check_branch
        %149 = sbr.rel (%p147) target = $region24
      $region23: #{tpu_custom_call.1} parent=5 // pred_region
        // Predicated region
        $region25: #{tpu_custom_call.1} parent=23 // pred_check
          %p150 = pneg %p49
        $region26: #{tpu_custom_call.1} parent=23 // pred_check_branch
          %152 = sbr.rel (%p150) target = $region28
        $region27: #{tpu_custom_call.1} parent=23 // pred_region
          %s153 = sand.u32 %s39, 1
          %s154 = scalar_lea.sflag [#allocation3], %s153
          %s155 = sand.u32 %s39, 1
          %s156 = smul.addr %s155, 768
          %s157 = scalar_lea.vmem [#allocation2], %s156
          %s158 = smul.u32 2, %s23
          %s160 = ssub.s32 12288, 12288
          %161 = vsyncadd %s154, %s160
          %s162 = smul.addr %s22, 96
          %s163 = sadd.s32 %s158, %s162
          %s164 = smul.addr %s163, 128
          %s165 = scalar_lea.hbm %s0, %s164
          %s166 = sshll.u32 %s157, 4
          %s167 = int_to_ptr.vmem [resolvable:$true] %s166
          %172 = dma.hbm_to_vmem [thread:$0]  %s165, 12288, %s167, %s154, 256, 256, 16
        $region28: #{tpu_custom_call.1} parent=23 // pred_fallthru
          _
      $region24: #{tpu_custom_call.1} parent=5 // pred_fallthru
        _
      %p173 = scmp.le.s32.totalorder 1, %s15
      %p174 = scmp.lt.s32.totalorder %s15, 3
      %p175 = pnand %p173, %p174
      %p176 = pneg %p175
      // Predicated region
      $region29: #{tpu_custom_call.1} parent=5 // pred_check
        _
      $region30: #{tpu_custom_call.1} parent=5 // pred_check_branch
        %178 = sbr.rel (%p175) target = $region32
      $region31: #{tpu_custom_call.1} parent=5 // pred_region
        %s179 = ssub.s32 %s15, 1
        %s180 = sand.u32 %s42, 1
        %s181 = scalar_lea.sflag [#allocation3], %s180
        %s182 = sand.u32 %s42, 1
        %s183 = smul.addr %s182, 768
        %s184 = scalar_lea.vmem [#allocation2], %s183
        // Predicated region
        $region33: #{tpu_custom_call.1} parent=31 // pred_check
          %p185 = pneg %p55
        $region34: #{tpu_custom_call.1} parent=31 // pred_check_branch
          %187 = sbr.rel (%p185) target = $region36
        $region35: #{tpu_custom_call.1} parent=31 // pred_region
          %188 = dma.done %s181, 12288
        $region36: #{tpu_custom_call.1} parent=31 // pred_fallthru
          _
        %s189 = sand.u32 %s42, 1
        %s190 = scalar_lea.sflag [#allocation3], %s189
        %s191 = sand.u32 %s42, 1
        %s192 = smul.addr %s191, 768
        %s193 = scalar_lea.vmem [#allocation2], %s192
        %p194 = pneg %p55
        %p195 = pneg %p52
        %p196 = pneg %p76
        %p197 = pneg %p73
        %p198 = pneg %p97
        %p199 = pneg %p94
        %p200 = pneg %p125
        %p201 = pneg %p122
        %s202 = sand.u32 %s112, 1
        %s203 = scalar_lea.sflag [#allocation4], %s202
        %s204 = sand.u32 %s112, 1
        %s205 = smul.addr %s204, 768
        %s206 = scalar_lea.vmem [#allocation5], %s205
        %s207 = smul.u32 2, %s25
        %s208 = smul.u32 2, %s25
        %v209 = vld [vmem:[%s184] sm:$0xff]
        %v210 = vld [vmem:[%s184 + $0x8] sm:$0xff]
        %v211 = vld [vmem:[%s184 + $0x10] sm:$0xff]
        %v212 = vld [vmem:[%s184 + $0x18] sm:$0xff]
        %v213 = vld [vmem:[%s184 + $0x20] sm:$0xff]
        %v214 = vld [vmem:[%s184 + $0x28] sm:$0xff]
        %v215 = vld [vmem:[%s184 + $0x30] sm:$0xff]
        %v216 = vld [vmem:[%s184 + $0x38] sm:$0xff]
        %v217 = vld [vmem:[%s184 + $0x40] sm:$0xff]
        %v218 = vld [vmem:[%s184 + $0x48] sm:$0xff]
        %v219 = vld [vmem:[%s184 + $0x50] sm:$0xff]
        %v220 = vld [vmem:[%s184 + $0x58] sm:$0xff]
        %v221 = vld [vmem:[%s184 + $0x60] sm:$0xff]
        %v222 = vld [vmem:[%s184 + $0x68] sm:$0xff]
        %v223 = vld [vmem:[%s184 + $0x70] sm:$0xff]
        %v224 = vld [vmem:[%s184 + $0x78] sm:$0xff]
        %v225 = vld [vmem:[%s184 + $0x80] sm:$0xff]
        %v226 = vld [vmem:[%s184 + $0x88] sm:$0xff]
        %v227 = vld [vmem:[%s184 + $0x90] sm:$0xff]
        %v228 = vld [vmem:[%s184 + $0x98] sm:$0xff]
        %v229 = vld [vmem:[%s184 + $0xa0] sm:$0xff]
        %v230 = vld [vmem:[%s184 + $0xa8] sm:$0xff]
        %v231 = vld [vmem:[%s184 + $0xb0] sm:$0xff]
        %v232 = vld [vmem:[%s184 + $0xb8] sm:$0xff]
        %v233 = vld [vmem:[%s184 + $0xc0] sm:$0xff]
        %v234 = vld [vmem:[%s184 + $0xc8] sm:$0xff]
        %v235 = vld [vmem:[%s184 + $0xd0] sm:$0xff]
        %v236 = vld [vmem:[%s184 + $0xd8] sm:$0xff]
        %v237 = vld [vmem:[%s184 + $0xe0] sm:$0xff]
        %v238 = vld [vmem:[%s184 + $0xe8] sm:$0xff]
        %v239 = vld [vmem:[%s184 + $0xf0] sm:$0xff]
        %v240 = vld [vmem:[%s184 + $0xf8] sm:$0xff]
        %v241 = vld [vmem:[%s184 + $0x100] sm:$0xff]
        %v242 = vld [vmem:[%s184 + $0x108] sm:$0xff]
        %v243 = vld [vmem:[%s184 + $0x110] sm:$0xff]
        %v244 = vld [vmem:[%s184 + $0x118] sm:$0xff]
        %v245 = vld [vmem:[%s184 + $0x120] sm:$0xff]
        %v246 = vld [vmem:[%s184 + $0x128] sm:$0xff]
        %v247 = vld [vmem:[%s184 + $0x130] sm:$0xff]
        %v248 = vld [vmem:[%s184 + $0x138] sm:$0xff]
        %v249 = vld [vmem:[%s184 + $0x140] sm:$0xff]
        %v250 = vld [vmem:[%s184 + $0x148] sm:$0xff]
        %v251 = vld [vmem:[%s184 + $0x150] sm:$0xff]
        %v252 = vld [vmem:[%s184 + $0x158] sm:$0xff]
        %v253 = vld [vmem:[%s184 + $0x160] sm:$0xff]
        %v254 = vld [vmem:[%s184 + $0x168] sm:$0xff]
        %v255 = vld [vmem:[%s184 + $0x170] sm:$0xff]
        %v256 = vld [vmem:[%s184 + $0x178] sm:$0xff]
        %v257 = vld [vmem:[%s184 + $0x180] sm:$0xff]
        %v258 = vld [vmem:[%s184 + $0x188] sm:$0xff]
        %v259 = vld [vmem:[%s184 + $0x190] sm:$0xff]
        %v260 = vld [vmem:[%s184 + $0x198] sm:$0xff]
        %v261 = vld [vmem:[%s184 + $0x1a0] sm:$0xff]
        %v262 = vld [vmem:[%s184 + $0x1a8] sm:$0xff]
        %v263 = vld [vmem:[%s184 + $0x1b0] sm:$0xff]
        %v264 = vld [vmem:[%s184 + $0x1b8] sm:$0xff]
        %v265 = vld [vmem:[%s184 + $0x1c0] sm:$0xff]
        %v266 = vld [vmem:[%s184 + $0x1c8] sm:$0xff]
        %v267 = vld [vmem:[%s184 + $0x1d0] sm:$0xff]
        %v268 = vld [vmem:[%s184 + $0x1d8] sm:$0xff]
        %v269 = vld [vmem:[%s184 + $0x1e0] sm:$0xff]
        %v270 = vld [vmem:[%s184 + $0x1e8] sm:$0xff]
        %v271 = vld [vmem:[%s184 + $0x1f0] sm:$0xff]
        %v272 = vld [vmem:[%s184 + $0x1f8] sm:$0xff]
        %v273 = vld [vmem:[%s184 + $0x200] sm:$0xff]
        %v274 = vld [vmem:[%s184 + $0x208] sm:$0xff]
        %v275 = vld [vmem:[%s184 + $0x210] sm:$0xff]
        %v276 = vld [vmem:[%s184 + $0x218] sm:$0xff]
        %v277 = vld [vmem:[%s184 + $0x220] sm:$0xff]
        %v278 = vld [vmem:[%s184 + $0x228] sm:$0xff]
        %v279 = vld [vmem:[%s184 + $0x230] sm:$0xff]
        %v280 = vld [vmem:[%s184 + $0x238] sm:$0xff]
        %v281 = vld [vmem:[%s184 + $0x240] sm:$0xff]
        %v282 = vld [vmem:[%s184 + $0x248] sm:$0xff]
        %v283 = vld [vmem:[%s184 + $0x250] sm:$0xff]
        %v284 = vld [vmem:[%s184 + $0x258] sm:$0xff]
        %v285 = vld [vmem:[%s184 + $0x260] sm:$0xff]
        %v286 = vld [vmem:[%s184 + $0x268] sm:$0xff]
        %v287 = vld [vmem:[%s184 + $0x270] sm:$0xff]
        %v288 = vld [vmem:[%s184 + $0x278] sm:$0xff]
        %v289 = vld [vmem:[%s184 + $0x280] sm:$0xff]
        %v290 = vld [vmem:[%s184 + $0x288] sm:$0xff]
        %v291 = vld [vmem:[%s184 + $0x290] sm:$0xff]
        %v292 = vld [vmem:[%s184 + $0x298] sm:$0xff]
        %v293 = vld [vmem:[%s184 + $0x2a0] sm:$0xff]
        %v294 = vld [vmem:[%s184 + $0x2a8] sm:$0xff]
        %v295 = vld [vmem:[%s184 + $0x2b0] sm:$0xff]
        %v296 = vld [vmem:[%s184 + $0x2b8] sm:$0xff]
        %v297 = vld [vmem:[%s184 + $0x2c0] sm:$0xff]
        %v298 = vld [vmem:[%s184 + $0x2c8] sm:$0xff]
        %v299 = vld [vmem:[%s184 + $0x2d0] sm:$0xff]
        %v300 = vld [vmem:[%s184 + $0x2d8] sm:$0xff]
        %v301 = vld [vmem:[%s184 + $0x2e0] sm:$0xff]
        %v302 = vld [vmem:[%s184 + $0x2e8] sm:$0xff]
        %v303 = vld [vmem:[%s184 + $0x2f0] sm:$0xff]
        %v304 = vld [vmem:[%s184 + $0x2f8] sm:$0xff]
        %v305 = vld [vmem:[%s1] sm:$0xff]
        %v306 = vld [vmem:[%s1 + $0x8] sm:$0xff]
        %v307 = vld [vmem:[%s1 + $0x10] sm:$0xff]
        %v308 = vld [vmem:[%s1 + $0x18] sm:$0xff]
        %v309 = vld [vmem:[%s1 + $0x20] sm:$0xff]
        %v310 = vld [vmem:[%s1 + $0x28] sm:$0xff]
        %v311 = vld [vmem:[%s1 + $0x30] sm:$0xff]
        %v312 = vld [vmem:[%s1 + $0x38] sm:$0xff]
        %v313 = vld [vmem:[%s1 + $0x40] sm:$0xff]
        %v314 = vld [vmem:[%s1 + $0x48] sm:$0xff]
        %v315 = vld [vmem:[%s1 + $0x50] sm:$0xff]
        %v316 = vld [vmem:[%s1 + $0x58] sm:$0xff]
        %v317 = vld [vmem:[%s1 + $0x60] sm:$0xff]
        %v318 = vld [vmem:[%s1 + $0x68] sm:$0xff]
        %v319 = vld [vmem:[%s1 + $0x70] sm:$0xff]
        %v320 = vld [vmem:[%s1 + $0x78] sm:$0xff]
        %v321 = vld [vmem:[%s1 + $0x80] sm:$0xff]
        %v322 = vld [vmem:[%s1 + $0x88] sm:$0xff]
        %v323 = vld [vmem:[%s1 + $0x90] sm:$0xff]
        %v324 = vld [vmem:[%s1 + $0x98] sm:$0xff]
        %v325 = vld [vmem:[%s1 + $0xa0] sm:$0xff]
        %v326 = vld [vmem:[%s1 + $0xa8] sm:$0xff]
        %v327 = vld [vmem:[%s1 + $0xb0] sm:$0xff]
        %v328 = vld [vmem:[%s1 + $0xb8] sm:$0xff]
        %v329 = vld [vmem:[%s1 + $0xc0] sm:$0xff]
        %v330 = vld [vmem:[%s1 + $0xc8] sm:$0xff]
        %v331 = vld [vmem:[%s1 + $0xd0] sm:$0xff]
        %v332 = vld [vmem:[%s1 + $0xd8] sm:$0xff]
        %v333 = vld [vmem:[%s1 + $0xe0] sm:$0xff]
        %v334 = vld [vmem:[%s1 + $0xe8] sm:$0xff]
        %v335 = vld [vmem:[%s1 + $0xf0] sm:$0xff]
        %v336 = vld [vmem:[%s1 + $0xf8] sm:$0xff]
        %v337 = vld [vmem:[%s1 + $0x100] sm:$0xff]
        %v338 = vld [vmem:[%s1 + $0x108] sm:$0xff]
        %v339 = vld [vmem:[%s1 + $0x110] sm:$0xff]
        %v340 = vld [vmem:[%s1 + $0x118] sm:$0xff]
        %v341 = vld [vmem:[%s1 + $0x120] sm:$0xff]
        %v342 = vld [vmem:[%s1 + $0x128] sm:$0xff]
        %v343 = vld [vmem:[%s1 + $0x130] sm:$0xff]
        %v344 = vld [vmem:[%s1 + $0x138] sm:$0xff]
        %v345 = vld [vmem:[%s1 + $0x140] sm:$0xff]
        %v346 = vld [vmem:[%s1 + $0x148] sm:$0xff]
        %v347 = vld [vmem:[%s1 + $0x150] sm:$0xff]
        %v348 = vld [vmem:[%s1 + $0x158] sm:$0xff]
        %v349 = vld [vmem:[%s1 + $0x160] sm:$0xff]
        %v350 = vld [vmem:[%s1 + $0x168] sm:$0xff]
        %v351 = vld [vmem:[%s1 + $0x170] sm:$0xff]
        %v352 = vld [vmem:[%s1 + $0x178] sm:$0xff]
        %v353 = vld [vmem:[%s2] sm:$0xff]
        %v354 = vld [vmem:[%s2 + $0x8] sm:$0xff]
        %v355 = vld [vmem:[%s2 + $0x10] sm:$0xff]
        %v356 = vld [vmem:[%s2 + $0x18] sm:$0xff]
        %v357 = vld [vmem:[%s2 + $0x20] sm:$0xff]
        %v358 = vld [vmem:[%s2 + $0x28] sm:$0xff]
        %v359 = vld [vmem:[%s2 + $0x30] sm:$0xff]
        %v360 = vld [vmem:[%s2 + $0x38] sm:$0xff]
        %v361 = vld [vmem:[%s2 + $0x40] sm:$0xff]
        %v362 = vld [vmem:[%s2 + $0x48] sm:$0xff]
        %v363 = vld [vmem:[%s2 + $0x50] sm:$0xff]
        %v364 = vld [vmem:[%s2 + $0x58] sm:$0xff]
        %v365 = vld [vmem:[%s2 + $0x60] sm:$0xff]
        %v366 = vld [vmem:[%s2 + $0x68] sm:$0xff]
        %v367 = vld [vmem:[%s2 + $0x70] sm:$0xff]
        %v368 = vld [vmem:[%s2 + $0x78] sm:$0xff]
        %v369 = vld [vmem:[%s2 + $0x80] sm:$0xff]
        %v370 = vld [vmem:[%s2 + $0x88] sm:$0xff]
        %v371 = vld [vmem:[%s2 + $0x90] sm:$0xff]
        %v372 = vld [vmem:[%s2 + $0x98] sm:$0xff]
        %v373 = vld [vmem:[%s2 + $0xa0] sm:$0xff]
        %v374 = vld [vmem:[%s2 + $0xa8] sm:$0xff]
        %v375 = vld [vmem:[%s2 + $0xb0] sm:$0xff]
        %v376 = vld [vmem:[%s2 + $0xb8] sm:$0xff]
        %v377 = vld [vmem:[%s2 + $0xc0] sm:$0xff]
        %v378 = vld [vmem:[%s2 + $0xc8] sm:$0xff]
        %v379 = vld [vmem:[%s2 + $0xd0] sm:$0xff]
        %v380 = vld [vmem:[%s2 + $0xd8] sm:$0xff]
        %v381 = vld [vmem:[%s2 + $0xe0] sm:$0xff]
        %v382 = vld [vmem:[%s2 + $0xe8] sm:$0xff]
        %v383 = vld [vmem:[%s2 + $0xf0] sm:$0xff]
        %v384 = vld [vmem:[%s2 + $0xf8] sm:$0xff]
        %v385 = vld [vmem:[%s2 + $0x100] sm:$0xff]
        %v386 = vld [vmem:[%s2 + $0x108] sm:$0xff]
        %v387 = vld [vmem:[%s2 + $0x110] sm:$0xff]
        %v388 = vld [vmem:[%s2 + $0x118] sm:$0xff]
        %v389 = vld [vmem:[%s2 + $0x120] sm:$0xff]
        %v390 = vld [vmem:[%s2 + $0x128] sm:$0xff]
        %v391 = vld [vmem:[%s2 + $0x130] sm:$0xff]
        %v392 = vld [vmem:[%s2 + $0x138] sm:$0xff]
        %v393 = vld [vmem:[%s2 + $0x140] sm:$0xff]
        %v394 = vld [vmem:[%s2 + $0x148] sm:$0xff]
        %v395 = vld [vmem:[%s2 + $0x150] sm:$0xff]
        %v396 = vld [vmem:[%s2 + $0x158] sm:$0xff]
        %v397 = vld [vmem:[%s2 + $0x160] sm:$0xff]
        %v398 = vld [vmem:[%s2 + $0x168] sm:$0xff]
        %v399 = vld [vmem:[%s2 + $0x170] sm:$0xff]
        %v400 = vld [vmem:[%s2 + $0x178] sm:$0xff]
        %v401 = vadd.f32 %v209, %v211
        %v402 = vadd.f32 %v401, %v213
        %v403 = vadd.f32 %v402, %v215
        %v404 = vadd.f32 %v403, %v217
        %v405 = vadd.f32 %v404, %v219
        %v406 = vadd.f32 %v405, %v221
        %v407 = vadd.f32 %v406, %v223
        %v408 = vadd.f32 %v407, %v225
        %v409 = vadd.f32 %v408, %v227
        %v410 = vadd.f32 %v409, %v229
        %v411 = vadd.f32 %v410, %v231
        %v412 = vadd.f32 %v411, %v233
        %v413 = vadd.f32 %v412, %v235
        %v414 = vadd.f32 %v413, %v237
        %v415 = vadd.f32 %v414, %v239
        %v416 = vadd.f32 %v415, %v241
        %v417 = vadd.f32 %v416, %v243
        %v418 = vadd.f32 %v417, %v245
        %v419 = vadd.f32 %v418, %v247
        %v420 = vadd.f32 %v419, %v249
        %v421 = vadd.f32 %v420, %v251
        %v422 = vadd.f32 %v421, %v253
        %v423 = vadd.f32 %v422, %v255
        %v424 = vadd.f32 %v423, %v257
        %v425 = vadd.f32 %v424, %v259
        %v426 = vadd.f32 %v425, %v261
        %v427 = vadd.f32 %v426, %v263
        %v428 = vadd.f32 %v427, %v265
        %v429 = vadd.f32 %v428, %v267
        %v430 = vadd.f32 %v429, %v269
        %v431 = vadd.f32 %v430, %v271
        %v432 = vadd.f32 %v431, %v273
        %v433 = vadd.f32 %v432, %v275
        %v434 = vadd.f32 %v433, %v277
        %v435 = vadd.f32 %v434, %v279
        %v436 = vadd.f32 %v435, %v281
        %v437 = vadd.f32 %v436, %v283
        %v438 = vadd.f32 %v437, %v285
        %v439 = vadd.f32 %v438, %v287
        %v440 = vadd.f32 %v439, %v289
        %v441 = vadd.f32 %v440, %v291
        %v442 = vadd.f32 %v441, %v293
        %v443 = vadd.f32 %v442, %v295
        %v444 = vadd.f32 %v443, %v297
        %v445 = vadd.f32 %v444, %v299
        %v446 = vadd.f32 %v445, %v301
        %v447 = vadd.f32 %v446, %v303
        %v448 = vrot.slane %v447, 4
        %v449 = vadd.f32 %v447, %v448
        %v450 = vrot.slane %v449, 2
        %v451 = vadd.f32 %v449, %v450
        %v452 = vrot.slane %v451, 1
        %v453 = vadd.f32 %v451, %v452
        %v454 = vadd.f32 %v210, %v212
        %v455 = vadd.f32 %v454, %v214
        %v456 = vadd.f32 %v455, %v216
        %v457 = vadd.f32 %v456, %v218
        %v458 = vadd.f32 %v457, %v220
        %v459 = vadd.f32 %v458, %v222
        %v460 = vadd.f32 %v459, %v224
        %v461 = vadd.f32 %v460, %v226
        %v462 = vadd.f32 %v461, %v228
        %v463 = vadd.f32 %v462, %v230
        %v464 = vadd.f32 %v463, %v232
        %v465 = vadd.f32 %v464, %v234
        %v466 = vadd.f32 %v465, %v236
        %v467 = vadd.f32 %v466, %v238
        %v468 = vadd.f32 %v467, %v240
        %v469 = vadd.f32 %v468, %v242
        %v470 = vadd.f32 %v469, %v244
        %v471 = vadd.f32 %v470, %v246
        %v472 = vadd.f32 %v471, %v248
        %v473 = vadd.f32 %v472, %v250
        %v474 = vadd.f32 %v473, %v252
        %v475 = vadd.f32 %v474, %v254
        %v476 = vadd.f32 %v475, %v256
        %v477 = vadd.f32 %v476, %v258
        %v478 = vadd.f32 %v477, %v260
        %v479 = vadd.f32 %v478, %v262
        %v480 = vadd.f32 %v479, %v264
        %v481 = vadd.f32 %v480, %v266
        %v482 = vadd.f32 %v481, %v268
        %v483 = vadd.f32 %v482, %v270
        %v484 = vadd.f32 %v483, %v272
        %v485 = vadd.f32 %v484, %v274
        %v486 = vadd.f32 %v485, %v276
        %v487 = vadd.f32 %v486, %v278
        %v488 = vadd.f32 %v487, %v280
        %v489 = vadd.f32 %v488, %v282
        %v490 = vadd.f32 %v489, %v284
        %v491 = vadd.f32 %v490, %v286
        %v492 = vadd.f32 %v491, %v288
        %v493 = vadd.f32 %v492, %v290
        %v494 = vadd.f32 %v493, %v292
        %v495 = vadd.f32 %v494, %v294
        %v496 = vadd.f32 %v495, %v296
        %v497 = vadd.f32 %v496, %v298
        %v498 = vadd.f32 %v497, %v300
        %v499 = vadd.f32 %v498, %v302
        %v500 = vadd.f32 %v499, %v304
        %v501 = vrot.slane %v500, 4
        %v502 = vadd.f32 %v500, %v501
        %v503 = vrot.slane %v502, 2
        %v504 = vadd.f32 %v502, %v503
        %v505 = vrot.slane %v504, 1
        %v506 = vadd.f32 %v504, %v505
        %v507 = vrcp.pop 384.0
        %v508 = vmul.f32 %v453, %v507
        %v509 = vmul.f32 %v506, %v507
        %v510 = vsub.f32 %v209, %v508
        %v511 = vsub.f32 %v210, %v509
        %v512 = vsub.f32 %v211, %v508
        %v513 = vsub.f32 %v212, %v509
        %v514 = vsub.f32 %v213, %v508
        %v515 = vsub.f32 %v214, %v509
        %v516 = vsub.f32 %v215, %v508
        %v517 = vsub.f32 %v216, %v509
        %v518 = vsub.f32 %v217, %v508
        %v519 = vsub.f32 %v218, %v509
        %v520 = vsub.f32 %v219, %v508
        %v521 = vsub.f32 %v220, %v509
        %v522 = vsub.f32 %v221, %v508
        %v523 = vsub.f32 %v222, %v509
        %v524 = vsub.f32 %v223, %v508
        %v525 = vsub.f32 %v224, %v509
        %v526 = vsub.f32 %v225, %v508
        %v527 = vsub.f32 %v226, %v509
        %v528 = vsub.f32 %v227, %v508
        %v529 = vsub.f32 %v228, %v509
        %v530 = vsub.f32 %v229, %v508
        %v531 = vsub.f32 %v230, %v509
        %v532 = vsub.f32 %v231, %v508
        %v533 = vsub.f32 %v232, %v509
        %v534 = vsub.f32 %v233, %v508
        %v535 = vsub.f32 %v234, %v509
        %v536 = vsub.f32 %v235, %v508
        %v537 = vsub.f32 %v236, %v509
        %v538 = vsub.f32 %v237, %v508
        %v539 = vsub.f32 %v238, %v509
        %v540 = vsub.f32 %v239, %v508
        %v541 = vsub.f32 %v240, %v509
        %v542 = vsub.f32 %v241, %v508
        %v543 = vsub.f32 %v242, %v509
        %v544 = vsub.f32 %v243, %v508
        %v545 = vsub.f32 %v244, %v509
        %v546 = vsub.f32 %v245, %v508
        %v547 = vsub.f32 %v246, %v509
        %v548 = vsub.f32 %v247, %v508
        %v549 = vsub.f32 %v248, %v509
        %v550 = vsub.f32 %v249, %v508
        %v551 = vsub.f32 %v250, %v509
        %v552 = vsub.f32 %v251, %v508
        %v553 = vsub.f32 %v252, %v509
        %v554 = vsub.f32 %v253, %v508
        %v555 = vsub.f32 %v254, %v509
        %v556 = vsub.f32 %v255, %v508
        %v557 = vsub.f32 %v256, %v509
        %v558 = vsub.f32 %v257, %v508
        %v559 = vsub.f32 %v258, %v509
        %v560 = vsub.f32 %v259, %v508
        %v561 = vsub.f32 %v260, %v509
        %v562 = vsub.f32 %v261, %v508
        %v563 = vsub.f32 %v262, %v509
        %v564 = vsub.f32 %v263, %v508
        %v565 = vsub.f32 %v264, %v509
        %v566 = vsub.f32 %v265, %v508
        %v567 = vsub.f32 %v266, %v509
        %v568 = vsub.f32 %v267, %v508
        %v569 = vsub.f32 %v268, %v509
        %v570 = vsub.f32 %v269, %v508
        %v571 = vsub.f32 %v270, %v509
        %v572 = vsub.f32 %v271, %v508
        %v573 = vsub.f32 %v272, %v509
        %v574 = vsub.f32 %v273, %v508
        %v575 = vsub.f32 %v274, %v509
        %v576 = vsub.f32 %v275, %v508
        %v577 = vsub.f32 %v276, %v509
        %v578 = vsub.f32 %v277, %v508
        %v579 = vsub.f32 %v278, %v509
        %v580 = vsub.f32 %v279, %v508
        %v581 = vsub.f32 %v280, %v509
        %v582 = vsub.f32 %v281, %v508
        %v583 = vsub.f32 %v282, %v509
        %v584 = vsub.f32 %v283, %v508
        %v585 = vsub.f32 %v284, %v509
        %v586 = vsub.f32 %v285, %v508
        %v587 = vsub.f32 %v286, %v509
        %v588 = vsub.f32 %v287, %v508
        %v589 = vsub.f32 %v288, %v509
        %v590 = vsub.f32 %v289, %v508
        %v591 = vsub.f32 %v290, %v509
        %v592 = vsub.f32 %v291, %v508
        %v593 = vsub.f32 %v292, %v509
        %v594 = vsub.f32 %v293, %v508
        %v595 = vsub.f32 %v294, %v509
        %v596 = vsub.f32 %v295, %v508
        %v597 = vsub.f32 %v296, %v509
        %v598 = vsub.f32 %v297, %v508
        %v599 = vsub.f32 %v298, %v509
        %v600 = vsub.f32 %v299, %v508
        %v601 = vsub.f32 %v300, %v509
        %v602 = vsub.f32 %v301, %v508
        %v603 = vsub.f32 %v302, %v509
        %v604 = vsub.f32 %v303, %v508
        %v605 = vsub.f32 %v304, %v509
        %v606 = vmul.f32 %v510, %v510
        %v607 = vmul.f32 %v511, %v511
        %v608 = vmul.f32 %v512, %v512
        %v609 = vmul.f32 %v513, %v513
        %v610 = vmul.f32 %v514, %v514
        %v611 = vmul.f32 %v515, %v515
        %v612 = vmul.f32 %v516, %v516
        %v613 = vmul.f32 %v517, %v517
        %v614 = vmul.f32 %v518, %v518
        %v615 = vmul.f32 %v519, %v519
        %v616 = vmul.f32 %v520, %v520
        %v617 = vmul.f32 %v521, %v521
        %v618 = vmul.f32 %v522, %v522
        %v619 = vmul.f32 %v523, %v523
        %v620 = vmul.f32 %v524, %v524
        %v621 = vmul.f32 %v525, %v525
        %v622 = vmul.f32 %v526, %v526
        %v623 = vmul.f32 %v527, %v527
        %v624 = vmul.f32 %v528, %v528
        %v625 = vmul.f32 %v529, %v529
        %v626 = vmul.f32 %v530, %v530
        %v627 = vmul.f32 %v531, %v531
        %v628 = vmul.f32 %v532, %v532
        %v629 = vmul.f32 %v533, %v533
        %v630 = vmul.f32 %v534, %v534
        %v631 = vmul.f32 %v535, %v535
        %v632 = vmul.f32 %v536, %v536
        %v633 = vmul.f32 %v537, %v537
        %v634 = vmul.f32 %v538, %v538
        %v635 = vmul.f32 %v539, %v539
        %v636 = vmul.f32 %v540, %v540
        %v637 = vmul.f32 %v541, %v541
        %v638 = vmul.f32 %v542, %v542
        %v639 = vmul.f32 %v543, %v543
        %v640 = vmul.f32 %v544, %v544
        %v641 = vmul.f32 %v545, %v545
        %v642 = vmul.f32 %v546, %v546
        %v643 = vmul.f32 %v547, %v547
        %v644 = vmul.f32 %v548, %v548
        %v645 = vmul.f32 %v549, %v549
        %v646 = vmul.f32 %v550, %v550
        %v647 = vmul.f32 %v551, %v551
        %v648 = vmul.f32 %v552, %v552
        %v649 = vmul.f32 %v553, %v553
        %v650 = vmul.f32 %v554, %v554
        %v651 = vmul.f32 %v555, %v555
        %v652 = vmul.f32 %v556, %v556
        %v653 = vmul.f32 %v557, %v557
        %v654 = vmul.f32 %v558, %v558
        %v655 = vmul.f32 %v559, %v559
        %v656 = vmul.f32 %v560, %v560
        %v657 = vmul.f32 %v561, %v561
        %v658 = vmul.f32 %v562, %v562
        %v659 = vmul.f32 %v563, %v563
        %v660 = vmul.f32 %v564, %v564
        %v661 = vmul.f32 %v565, %v565
        %v662 = vmul.f32 %v566, %v566
        %v663 = vmul.f32 %v567, %v567
        %v664 = vmul.f32 %v568, %v568
        %v665 = vmul.f32 %v569, %v569
        %v666 = vmul.f32 %v570, %v570
        %v667 = vmul.f32 %v571, %v571
        %v668 = vmul.f32 %v572, %v572
        %v669 = vmul.f32 %v573, %v573
        %v670 = vmul.f32 %v574, %v574
        %v671 = vmul.f32 %v575, %v575
        %v672 = vmul.f32 %v576, %v576
        %v673 = vmul.f32 %v577, %v577
        %v674 = vmul.f32 %v578, %v578
        %v675 = vmul.f32 %v579, %v579
        %v676 = vmul.f32 %v580, %v580
        %v677 = vmul.f32 %v581, %v581
        %v678 = vmul.f32 %v582, %v582
        %v679 = vmul.f32 %v583, %v583
        %v680 = vmul.f32 %v584, %v584
        %v681 = vmul.f32 %v585, %v585
        %v682 = vmul.f32 %v586, %v586
        %v683 = vmul.f32 %v587, %v587
        %v684 = vmul.f32 %v588, %v588
        %v685 = vmul.f32 %v589, %v589
        %v686 = vmul.f32 %v590, %v590
        %v687 = vmul.f32 %v591, %v591
        %v688 = vmul.f32 %v592, %v592
        %v689 = vmul.f32 %v593, %v593
        %v690 = vmul.f32 %v594, %v594
        %v691 = vmul.f32 %v595, %v595
        %v692 = vmul.f32 %v596, %v596
        %v693 = vmul.f32 %v597, %v597
        %v694 = vmul.f32 %v598, %v598
        %v695 = vmul.f32 %v599, %v599
        %v696 = vmul.f32 %v600, %v600
        %v697 = vmul.f32 %v601, %v601
        %v698 = vmul.f32 %v602, %v602
        %v699 = vmul.f32 %v603, %v603
        %v700 = vmul.f32 %v604, %v604
        %v701 = vmul.f32 %v605, %v605
        %v702 = vadd.f32 %v606, %v608
        %v703 = vadd.f32 %v702, %v610
        %v704 = vadd.f32 %v703, %v612
        %v705 = vadd.f32 %v704, %v614
        %v706 = vadd.f32 %v705, %v616
        %v707 = vadd.f32 %v706, %v618
        %v708 = vadd.f32 %v707, %v620
        %v709 = vadd.f32 %v708, %v622
        %v710 = vadd.f32 %v709, %v624
        %v711 = vadd.f32 %v710, %v626
        %v712 = vadd.f32 %v711, %v628
        %v713 = vadd.f32 %v712, %v630
        %v714 = vadd.f32 %v713, %v632
        %v715 = vadd.f32 %v714, %v634
        %v716 = vadd.f32 %v715, %v636
        %v717 = vadd.f32 %v716, %v638
        %v718 = vadd.f32 %v717, %v640
        %v719 = vadd.f32 %v718, %v642
        %v720 = vadd.f32 %v719, %v644
        %v721 = vadd.f32 %v720, %v646
        %v722 = vadd.f32 %v721, %v648
        %v723 = vadd.f32 %v722, %v650
        %v724 = vadd.f32 %v723, %v652
        %v725 = vadd.f32 %v724, %v654
        %v726 = vadd.f32 %v725, %v656
        %v727 = vadd.f32 %v726, %v658
        %v728 = vadd.f32 %v727, %v660
        %v729 = vadd.f32 %v728, %v662
        %v730 = vadd.f32 %v729, %v664
        %v731 = vadd.f32 %v730, %v666
        %v732 = vadd.f32 %v731, %v668
        %v733 = vadd.f32 %v732, %v670
        %v734 = vadd.f32 %v733, %v672
        %v735 = vadd.f32 %v734, %v674
        %v736 = vadd.f32 %v735, %v676
        %v737 = vadd.f32 %v736, %v678
        %v738 = vadd.f32 %v737, %v680
        %v739 = vadd.f32 %v738, %v682
        %v740 = vadd.f32 %v739, %v684
        %v741 = vadd.f32 %v740, %v686
        %v742 = vadd.f32 %v741, %v688
        %v743 = vadd.f32 %v742, %v690
        %v744 = vadd.f32 %v743, %v692
        %v745 = vadd.f32 %v744, %v694
        %v746 = vadd.f32 %v745, %v696
        %v747 = vadd.f32 %v746, %v698
        %v748 = vadd.f32 %v747, %v700
        %v749 = vrot.slane %v748, 4
        %v750 = vadd.f32 %v748, %v749
        %v751 = vrot.slane %v750, 2
        %v752 = vadd.f32 %v750, %v751
        %v753 = vrot.slane %v752, 1
        %v754 = vadd.f32 %v752, %v753
        %v755 = vadd.f32 %v607, %v609
        %v756 = vadd.f32 %v755, %v611
        %v757 = vadd.f32 %v756, %v613
        %v758 = vadd.f32 %v757, %v615
        %v759 = vadd.f32 %v758, %v617
        %v760 = vadd.f32 %v759, %v619
        %v761 = vadd.f32 %v760, %v621
        %v762 = vadd.f32 %v761, %v623
        %v763 = vadd.f32 %v762, %v625
        %v764 = vadd.f32 %v763, %v627
        %v765 = vadd.f32 %v764, %v629
        %v766 = vadd.f32 %v765, %v631
        %v767 = vadd.f32 %v766, %v633
        %v768 = vadd.f32 %v767, %v635
        %v769 = vadd.f32 %v768, %v637
        %v770 = vadd.f32 %v769, %v639
        %v771 = vadd.f32 %v770, %v641
        %v772 = vadd.f32 %v771, %v643
        %v773 = vadd.f32 %v772, %v645
        %v774 = vadd.f32 %v773, %v647
        %v775 = vadd.f32 %v774, %v649
        %v776 = vadd.f32 %v775, %v651
        %v777 = vadd.f32 %v776, %v653
        %v778 = vadd.f32 %v777, %v655
        %v779 = vadd.f32 %v778, %v657
        %v780 = vadd.f32 %v779, %v659
        %v781 = vadd.f32 %v780, %v661
        %v782 = vadd.f32 %v781, %v663
        %v783 = vadd.f32 %v782, %v665
        %v784 = vadd.f32 %v783, %v667
        %v785 = vadd.f32 %v784, %v669
        %v786 = vadd.f32 %v785, %v671
        %v787 = vadd.f32 %v786, %v673
        %v788 = vadd.f32 %v787, %v675
        %v789 = vadd.f32 %v788, %v677
        %v790 = vadd.f32 %v789, %v679
        %v791 = vadd.f32 %v790, %v681
        %v792 = vadd.f32 %v791, %v683
        %v793 = vadd.f32 %v792, %v685
        %v794 = vadd.f32 %v793, %v687
        %v795 = vadd.f32 %v794, %v689
        %v796 = vadd.f32 %v795, %v691
        %v797 = vadd.f32 %v796, %v693
        %v798 = vadd.f32 %v797, %v695
        %v799 = vadd.f32 %v798, %v697
        %v800 = vadd.f32 %v799, %v699
        %v801 = vadd.f32 %v800, %v701
        %v802 = vrot.slane %v801, 4
        %v803 = vadd.f32 %v801, %v802
        %v804 = vrot.slane %v803, 2
        %v805 = vadd.f32 %v803, %v804
        %v806 = vrot.slane %v805, 1
        %v807 = vadd.f32 %v805, %v806
        %v808 = vmul.f32 %v754, %v507
        %v809 = vmul.f32 %v807, %v507
        %v810 = vadd.f32 %v808, 1e-06
        %v811 = vadd.f32 %v809, 1e-06
        %v812 = vrsqrt.pop %v810
        %v813 = vrsqrt.pop %v811
        %815 = vset.pattern.permute.xlu0 0
        %816 = vperm.xlu0 %815, %v305
        %v817 = vpop.permute.xlu0 %816
        %820 = vset.pattern.permute.xlu0 0
        %821 = vperm.xlu0 %820, %v306
        %v822 = vpop.permute.xlu0 %821
        %825 = vset.pattern.permute.xlu0 0
        %826 = vperm.xlu0 %825, %v307
        %v827 = vpop.permute.xlu0 %826
        %830 = vset.pattern.permute.xlu0 0
        %831 = vperm.xlu0 %830, %v308
        %v832 = vpop.permute.xlu0 %831
        %835 = vset.pattern.permute.xlu0 0
        %836 = vperm.xlu0 %835, %v309
        %v837 = vpop.permute.xlu0 %836
        %840 = vset.pattern.permute.xlu0 0
        %841 = vperm.xlu0 %840, %v310
        %v842 = vpop.permute.xlu0 %841
        %845 = vset.pattern.permute.xlu0 0
        %846 = vperm.xlu0 %845, %v311
        %v847 = vpop.permute.xlu0 %846
        %850 = vset.pattern.permute.xlu0 0
        %851 = vperm.xlu0 %850, %v312
        %v852 = vpop.permute.xlu0 %851
        %855 = vset.pattern.permute.xlu0 0
        %856 = vperm.xlu0 %855, %v313
        %v857 = vpop.permute.xlu0 %856
        %860 = vset.pattern.permute.xlu0 0
        %861 = vperm.xlu0 %860, %v314
        %v862 = vpop.permute.xlu0 %861
        %865 = vset.pattern.permute.xlu0 0
        %866 = vperm.xlu0 %865, %v315
        %v867 = vpop.permute.xlu0 %866
        %870 = vset.pattern.permute.xlu0 0
        %871 = vperm.xlu0 %870, %v316
        %v872 = vpop.permute.xlu0 %871
        %875 = vset.pattern.permute.xlu0 0
        %876 = vperm.xlu0 %875, %v317
        %v877 = vpop.permute.xlu0 %876
        %880 = vset.pattern.permute.xlu0 0
        %881 = vperm.xlu0 %880, %v318
        %v882 = vpop.permute.xlu0 %881
        %885 = vset.pattern.permute.xlu0 0
        %886 = vperm.xlu0 %885, %v319
        %v887 = vpop.permute.xlu0 %886
        %890 = vset.pattern.permute.xlu0 0
        %891 = vperm.xlu0 %890, %v320
        %v892 = vpop.permute.xlu0 %891
        %895 = vset.pattern.permute.xlu0 0
        %896 = vperm.xlu0 %895, %v321
        %v897 = vpop.permute.xlu0 %896
        %900 = vset.pattern.permute.xlu0 0
        %901 = vperm.xlu0 %900, %v322
        %v902 = vpop.permute.xlu0 %901
        %905 = vset.pattern.permute.xlu0 0
        %906 = vperm.xlu0 %905, %v323
        %v907 = vpop.permute.xlu0 %906
        %910 = vset.pattern.permute.xlu0 0
        %911 = vperm.xlu0 %910, %v324
        %v912 = vpop.permute.xlu0 %911
        %915 = vset.pattern.permute.xlu0 0
        %916 = vperm.xlu0 %915, %v325
        %v917 = vpop.permute.xlu0 %916
        %920 = vset.pattern.permute.xlu0 0
        %921 = vperm.xlu0 %920, %v326
        %v922 = vpop.permute.xlu0 %921
        %925 = vset.pattern.permute.xlu0 0
        %926 = vperm.xlu0 %925, %v327
        %v927 = vpop.permute.xlu0 %926
        %930 = vset.pattern.permute.xlu0 0
        %931 = vperm.xlu0 %930, %v328
        %v932 = vpop.permute.xlu0 %931
        %935 = vset.pattern.permute.xlu0 0
        %936 = vperm.xlu0 %935, %v329
        %v937 = vpop.permute.xlu0 %936
        %940 = vset.pattern.permute.xlu0 0
        %941 = vperm.xlu0 %940, %v330
        %v942 = vpop.permute.xlu0 %941
        %945 = vset.pattern.permute.xlu0 0
        %946 = vperm.xlu0 %945, %v331
        %v947 = vpop.permute.xlu0 %946
        %950 = vset.pattern.permute.xlu0 0
        %951 = vperm.xlu0 %950, %v332
        %v952 = vpop.permute.xlu0 %951
        %955 = vset.pattern.permute.xlu0 0
        %956 = vperm.xlu0 %955, %v333
        %v957 = vpop.permute.xlu0 %956
        %960 = vset.pattern.permute.xlu0 0
        %961 = vperm.xlu0 %960, %v334
        %v962 = vpop.permute.xlu0 %961
        %965 = vset.pattern.permute.xlu0 0
        %966 = vperm.xlu0 %965, %v335
        %v967 = vpop.permute.xlu0 %966
        %970 = vset.pattern.permute.xlu0 0
        %971 = vperm.xlu0 %970, %v336
        %v972 = vpop.permute.xlu0 %971
        %975 = vset.pattern.permute.xlu0 0
        %976 = vperm.xlu0 %975, %v337
        %v977 = vpop.permute.xlu0 %976
        %980 = vset.pattern.permute.xlu0 0
        %981 = vperm.xlu0 %980, %v338
        %v982 = vpop.permute.xlu0 %981
        %985 = vset.pattern.permute.xlu0 0
        %986 = vperm.xlu0 %985, %v339
        %v987 = vpop.permute.xlu0 %986
        %990 = vset.pattern.permute.xlu0 0
        %991 = vperm.xlu0 %990, %v340
        %v992 = vpop.permute.xlu0 %991
        %995 = vset.pattern.permute.xlu0 0
        %996 = vperm.xlu0 %995, %v341
        %v997 = vpop.permute.xlu0 %996
        %1000 = vset.pattern.permute.xlu0 0
        %1001 = vperm.xlu0 %1000, %v342
        %v1002 = vpop.permute.xlu0 %1001
        %1005 = vset.pattern.permute.xlu0 0
        %1006 = vperm.xlu0 %1005, %v343
        %v1007 = vpop.permute.xlu0 %1006
        %1010 = vset.pattern.permute.xlu0 0
        %1011 = vperm.xlu0 %1010, %v344
        %v1012 = vpop.permute.xlu0 %1011
        %1015 = vset.pattern.permute.xlu0 0
        %1016 = vperm.xlu0 %1015, %v345
        %v1017 = vpop.permute.xlu0 %1016
        %1020 = vset.pattern.permute.xlu0 0
        %1021 = vperm.xlu0 %1020, %v346
        %v1022 = vpop.permute.xlu0 %1021
        %1025 = vset.pattern.permute.xlu0 0
        %1026 = vperm.xlu0 %1025, %v347
        %v1027 = vpop.permute.xlu0 %1026
        %1030 = vset.pattern.permute.xlu0 0
        %1031 = vperm.xlu0 %1030, %v348
        %v1032 = vpop.permute.xlu0 %1031
        %1035 = vset.pattern.permute.xlu0 0
        %1036 = vperm.xlu0 %1035, %v349
        %v1037 = vpop.permute.xlu0 %1036
        %1040 = vset.pattern.permute.xlu0 0
        %1041 = vperm.xlu0 %1040, %v350
        %v1042 = vpop.permute.xlu0 %1041
        %1045 = vset.pattern.permute.xlu0 0
        %1046 = vperm.xlu0 %1045, %v351
        %v1047 = vpop.permute.xlu0 %1046
        %1050 = vset.pattern.permute.xlu0 0
        %1051 = vperm.xlu0 %1050, %v352
        %v1052 = vpop.permute.xlu0 %1051
        %v1054 = vmul.f32 %v817, %v812
        %v1055 = vmul.f32 %v817, %v813
        %v1056 = vmul.f32 %v822, %v812
        %v1057 = vmul.f32 %v822, %v813
        %v1058 = vmul.f32 %v827, %v812
        %v1059 = vmul.f32 %v827, %v813
        %v1060 = vmul.f32 %v832, %v812
        %v1061 = vmul.f32 %v832, %v813
        %v1062 = vmul.f32 %v837, %v812
        %v1063 = vmul.f32 %v837, %v813
        %v1064 = vmul.f32 %v842, %v812
        %v1065 = vmul.f32 %v842, %v813
        %v1066 = vmul.f32 %v847, %v812
        %v1067 = vmul.f32 %v847, %v813
        %v1068 = vmul.f32 %v852, %v812
        %v1069 = vmul.f32 %v852, %v813
        %v1070 = vmul.f32 %v857, %v812
        %v1071 = vmul.f32 %v857, %v813
        %v1072 = vmul.f32 %v862, %v812
        %v1073 = vmul.f32 %v862, %v813
        %v1074 = vmul.f32 %v867, %v812
        %v1075 = vmul.f32 %v867, %v813
        %v1076 = vmul.f32 %v872, %v812
        %v1077 = vmul.f32 %v872, %v813
        %v1078 = vmul.f32 %v877, %v812
        %v1079 = vmul.f32 %v877, %v813
        %v1080 = vmul.f32 %v882, %v812
        %v1081 = vmul.f32 %v882, %v813
        %v1082 = vmul.f32 %v887, %v812
        %v1083 = vmul.f32 %v887, %v813
        %v1084 = vmul.f32 %v892, %v812
        %v1085 = vmul.f32 %v892, %v813
        %v1086 = vmul.f32 %v897, %v812
        %v1087 = vmul.f32 %v897, %v813
        %v1088 = vmul.f32 %v902, %v812
        %v1089 = vmul.f32 %v902, %v813
        %v1090 = vmul.f32 %v907, %v812
        %v1091 = vmul.f32 %v907, %v813
        %v1092 = vmul.f32 %v912, %v812
        %v1093 = vmul.f32 %v912, %v813
        %v1094 = vmul.f32 %v917, %v812
        %v1095 = vmul.f32 %v917, %v813
        %v1096 = vmul.f32 %v922, %v812
        %v1097 = vmul.f32 %v922, %v813
        %v1098 = vmul.f32 %v927, %v812
        %v1099 = vmul.f32 %v927, %v813
        %v1100 = vmul.f32 %v932, %v812
        %v1101 = vmul.f32 %v932, %v813
        %v1102 = vmul.f32 %v937, %v812
        %v1103 = vmul.f32 %v937, %v813
        %v1104 = vmul.f32 %v942, %v812
        %v1105 = vmul.f32 %v942, %v813
        %v1106 = vmul.f32 %v947, %v812
        %v1107 = vmul.f32 %v947, %v813
        %v1108 = vmul.f32 %v952, %v812
        %v1109 = vmul.f32 %v952, %v813
        %v1110 = vmul.f32 %v957, %v812
        %v1111 = vmul.f32 %v957, %v813
        %v1112 = vmul.f32 %v962, %v812
        %v1113 = vmul.f32 %v962, %v813
        %v1114 = vmul.f32 %v967, %v812
        %v1115 = vmul.f32 %v967, %v813
        %v1116 = vmul.f32 %v972, %v812
        %v1117 = vmul.f32 %v972, %v813
        %v1118 = vmul.f32 %v977, %v812
        %v1119 = vmul.f32 %v977, %v813
        %v1120 = vmul.f32 %v982, %v812
        %v1121 = vmul.f32 %v982, %v813
        %v1122 = vmul.f32 %v987, %v812
        %v1123 = vmul.f32 %v987, %v813
        %v1124 = vmul.f32 %v992, %v812
        %v1125 = vmul.f32 %v992, %v813
        %v1126 = vmul.f32 %v997, %v812
        %v1127 = vmul.f32 %v997, %v813
        %v1128 = vmul.f32 %v1002, %v812
        %v1129 = vmul.f32 %v1002, %v813
        %v1130 = vmul.f32 %v1007, %v812
        %v1131 = vmul.f32 %v1007, %v813
        %v1132 = vmul.f32 %v1012, %v812
        %v1133 = vmul.f32 %v1012, %v813
        %v1134 = vmul.f32 %v1017, %v812
        %v1135 = vmul.f32 %v1017, %v813
        %v1136 = vmul.f32 %v1022, %v812
        %v1137 = vmul.f32 %v1022, %v813
        %v1138 = vmul.f32 %v1027, %v812
        %v1139 = vmul.f32 %v1027, %v813
        %v1140 = vmul.f32 %v1032, %v812
        %v1141 = vmul.f32 %v1032, %v813
        %v1142 = vmul.f32 %v1037, %v812
        %v1143 = vmul.f32 %v1037, %v813
        %v1144 = vmul.f32 %v1042, %v812
        %v1145 = vmul.f32 %v1042, %v813
        %v1146 = vmul.f32 %v1047, %v812
        %v1147 = vmul.f32 %v1047, %v813
        %v1148 = vmul.f32 %v1052, %v812
        %v1149 = vmul.f32 %v1052, %v813
        %v1150 = vmul.f32 %v510, %v1054
        %v1151 = vmul.f32 %v511, %v1055
        %v1152 = vmul.f32 %v512, %v1056
        %v1153 = vmul.f32 %v513, %v1057
        %v1154 = vmul.f32 %v514, %v1058
        %v1155 = vmul.f32 %v515, %v1059
        %v1156 = vmul.f32 %v516, %v1060
        %v1157 = vmul.f32 %v517, %v1061
        %v1158 = vmul.f32 %v518, %v1062
        %v1159 = vmul.f32 %v519, %v1063
        %v1160 = vmul.f32 %v520, %v1064
        %v1161 = vmul.f32 %v521, %v1065
        %v1162 = vmul.f32 %v522, %v1066
        %v1163 = vmul.f32 %v523, %v1067
        %v1164 = vmul.f32 %v524, %v1068
        %v1165 = vmul.f32 %v525, %v1069
        %v1166 = vmul.f32 %v526, %v1070
        %v1167 = vmul.f32 %v527, %v1071
        %v1168 = vmul.f32 %v528, %v1072
        %v1169 = vmul.f32 %v529, %v1073
        %v1170 = vmul.f32 %v530, %v1074
        %v1171 = vmul.f32 %v531, %v1075
        %v1172 = vmul.f32 %v532, %v1076
        %v1173 = vmul.f32 %v533, %v1077
        %v1174 = vmul.f32 %v534, %v1078
        %v1175 = vmul.f32 %v535, %v1079
        %v1176 = vmul.f32 %v536, %v1080
        %v1177 = vmul.f32 %v537, %v1081
        %v1178 = vmul.f32 %v538, %v1082
        %v1179 = vmul.f32 %v539, %v1083
        %v1180 = vmul.f32 %v540, %v1084
        %v1181 = vmul.f32 %v541, %v1085
        %v1182 = vmul.f32 %v542, %v1086
        %v1183 = vmul.f32 %v543, %v1087
        %v1184 = vmul.f32 %v544, %v1088
        %v1185 = vmul.f32 %v545, %v1089
        %v1186 = vmul.f32 %v546, %v1090
        %v1187 = vmul.f32 %v547, %v1091
        %v1188 = vmul.f32 %v548, %v1092
        %v1189 = vmul.f32 %v549, %v1093
        %v1190 = vmul.f32 %v550, %v1094
        %v1191 = vmul.f32 %v551, %v1095
        %v1192 = vmul.f32 %v552, %v1096
        %v1193 = vmul.f32 %v553, %v1097
        %v1194 = vmul.f32 %v554, %v1098
        %v1195 = vmul.f32 %v555, %v1099
        %v1196 = vmul.f32 %v556, %v1100
        %v1197 = vmul.f32 %v557, %v1101
        %v1198 = vmul.f32 %v558, %v1102
        %v1199 = vmul.f32 %v559, %v1103
        %v1200 = vmul.f32 %v560, %v1104
        %v1201 = vmul.f32 %v561, %v1105
        %v1202 = vmul.f32 %v562, %v1106
        %v1203 = vmul.f32 %v563, %v1107
        %v1204 = vmul.f32 %v564, %v1108
        %v1205 = vmul.f32 %v565, %v1109
        %v1206 = vmul.f32 %v566, %v1110
        %v1207 = vmul.f32 %v567, %v1111
        %v1208 = vmul.f32 %v568, %v1112
        %v1209 = vmul.f32 %v569, %v1113
        %v1210 = vmul.f32 %v570, %v1114
        %v1211 = vmul.f32 %v571, %v1115
        %v1212 = vmul.f32 %v572, %v1116
        %v1213 = vmul.f32 %v573, %v1117
        %v1214 = vmul.f32 %v574, %v1118
        %v1215 = vmul.f32 %v575, %v1119
        %v1216 = vmul.f32 %v576, %v1120
        %v1217 = vmul.f32 %v577, %v1121
        %v1218 = vmul.f32 %v578, %v1122
        %v1219 = vmul.f32 %v579, %v1123
        %v1220 = vmul.f32 %v580, %v1124
        %v1221 = vmul.f32 %v581, %v1125
        %v1222 = vmul.f32 %v582, %v1126
        %v1223 = vmul.f32 %v583, %v1127
        %v1224 = vmul.f32 %v584, %v1128
        %v1225 = vmul.f32 %v585, %v1129
        %v1226 = vmul.f32 %v586, %v1130
        %v1227 = vmul.f32 %v587, %v1131
        %v1228 = vmul.f32 %v588, %v1132
        %v1229 = vmul.f32 %v589, %v1133
        %v1230 = vmul.f32 %v590, %v1134
        %v1231 = vmul.f32 %v591, %v1135
        %v1232 = vmul.f32 %v592, %v1136
        %v1233 = vmul.f32 %v593, %v1137
        %v1234 = vmul.f32 %v594, %v1138
        %v1235 = vmul.f32 %v595, %v1139
        %v1236 = vmul.f32 %v596, %v1140
        %v1237 = vmul.f32 %v597, %v1141
        %v1238 = vmul.f32 %v598, %v1142
        %v1239 = vmul.f32 %v599, %v1143
        %v1240 = vmul.f32 %v600, %v1144
        %v1241 = vmul.f32 %v601, %v1145
        %v1242 = vmul.f32 %v602, %v1146
        %v1243 = vmul.f32 %v603, %v1147
        %v1244 = vmul.f32 %v604, %v1148
        %v1245 = vmul.f32 %v605, %v1149
        %1247 = vset.pattern.permute.xlu0 0
        %1248 = vperm.xlu0 %1247, %v353
        %v1249 = vpop.permute.xlu0 %1248
        %1252 = vset.pattern.permute.xlu0 0
        %1253 = vperm.xlu0 %1252, %v354
        %v1254 = vpop.permute.xlu0 %1253
        %1257 = vset.pattern.permute.xlu0 0
        %1258 = vperm.xlu0 %1257, %v355
        %v1259 = vpop.permute.xlu0 %1258
        %1262 = vset.pattern.permute.xlu0 0
        %1263 = vperm.xlu0 %1262, %v356
        %v1264 = vpop.permute.xlu0 %1263
        %1267 = vset.pattern.permute.xlu0 0
        %1268 = vperm.xlu0 %1267, %v357
        %v1269 = vpop.permute.xlu0 %1268
        %1272 = vset.pattern.permute.xlu0 0
        %1273 = vperm.xlu0 %1272, %v358
        %v1274 = vpop.permute.xlu0 %1273
        %1277 = vset.pattern.permute.xlu0 0
        %1278 = vperm.xlu0 %1277, %v359
        %v1279 = vpop.permute.xlu0 %1278
        %1282 = vset.pattern.permute.xlu0 0
        %1283 = vperm.xlu0 %1282, %v360
        %v1284 = vpop.permute.xlu0 %1283
        %1287 = vset.pattern.permute.xlu0 0
        %1288 = vperm.xlu0 %1287, %v361
        %v1289 = vpop.permute.xlu0 %1288
        %1292 = vset.pattern.permute.xlu0 0
        %1293 = vperm.xlu0 %1292, %v362
        %v1294 = vpop.permute.xlu0 %1293
        %1297 = vset.pattern.permute.xlu0 0
        %1298 = vperm.xlu0 %1297, %v363
        %v1299 = vpop.permute.xlu0 %1298
        %1302 = vset.pattern.permute.xlu0 0
        %1303 = vperm.xlu0 %1302, %v364
        %v1304 = vpop.permute.xlu0 %1303
        %1307 = vset.pattern.permute.xlu0 0
        %1308 = vperm.xlu0 %1307, %v365
        %v1309 = vpop.permute.xlu0 %1308
        %1312 = vset.pattern.permute.xlu0 0
        %1313 = vperm.xlu0 %1312, %v366
        %v1314 = vpop.permute.xlu0 %1313
        %1317 = vset.pattern.permute.xlu0 0
        %1318 = vperm.xlu0 %1317, %v367
        %v1319 = vpop.permute.xlu0 %1318
        %1322 = vset.pattern.permute.xlu0 0
        %1323 = vperm.xlu0 %1322, %v368
        %v1324 = vpop.permute.xlu0 %1323
        %1327 = vset.pattern.permute.xlu0 0
        %1328 = vperm.xlu0 %1327, %v369
        %v1329 = vpop.permute.xlu0 %1328
        %1332 = vset.pattern.permute.xlu0 0
        %1333 = vperm.xlu0 %1332, %v370
        %v1334 = vpop.permute.xlu0 %1333
        %1337 = vset.pattern.permute.xlu0 0
        %1338 = vperm.xlu0 %1337, %v371
        %v1339 = vpop.permute.xlu0 %1338
        %1342 = vset.pattern.permute.xlu0 0
        %1343 = vperm.xlu0 %1342, %v372
        %v1344 = vpop.permute.xlu0 %1343
        %1347 = vset.pattern.permute.xlu0 0
        %1348 = vperm.xlu0 %1347, %v373
        %v1349 = vpop.permute.xlu0 %1348
        %1352 = vset.pattern.permute.xlu0 0
        %1353 = vperm.xlu0 %1352, %v374
        %v1354 = vpop.permute.xlu0 %1353
        %1357 = vset.pattern.permute.xlu0 0
        %1358 = vperm.xlu0 %1357, %v375
        %v1359 = vpop.permute.xlu0 %1358
        %1362 = vset.pattern.permute.xlu0 0
        %1363 = vperm.xlu0 %1362, %v376
        %v1364 = vpop.permute.xlu0 %1363
        %1367 = vset.pattern.permute.xlu0 0
        %1368 = vperm.xlu0 %1367, %v377
        %v1369 = vpop.permute.xlu0 %1368
        %1372 = vset.pattern.permute.xlu0 0
        %1373 = vperm.xlu0 %1372, %v378
        %v1374 = vpop.permute.xlu0 %1373
        %1377 = vset.pattern.permute.xlu0 0
        %1378 = vperm.xlu0 %1377, %v379
        %v1379 = vpop.permute.xlu0 %1378
        %1382 = vset.pattern.permute.xlu0 0
        %1383 = vperm.xlu0 %1382, %v380
        %v1384 = vpop.permute.xlu0 %1383
        %1387 = vset.pattern.permute.xlu0 0
        %1388 = vperm.xlu0 %1387, %v381
        %v1389 = vpop.permute.xlu0 %1388
        %1392 = vset.pattern.permute.xlu0 0
        %1393 = vperm.xlu0 %1392, %v382
        %v1394 = vpop.permute.xlu0 %1393
        %1397 = vset.pattern.permute.xlu0 0
        %1398 = vperm.xlu0 %1397, %v383
        %v1399 = vpop.permute.xlu0 %1398
        %1402 = vset.pattern.permute.xlu0 0
        %1403 = vperm.xlu0 %1402, %v384
        %v1404 = vpop.permute.xlu0 %1403
        %1407 = vset.pattern.permute.xlu0 0
        %1408 = vperm.xlu0 %1407, %v385
        %v1409 = vpop.permute.xlu0 %1408
        %1412 = vset.pattern.permute.xlu0 0
        %1413 = vperm.xlu0 %1412, %v386
        %v1414 = vpop.permute.xlu0 %1413
        %1417 = vset.pattern.permute.xlu0 0
        %1418 = vperm.xlu0 %1417, %v387
        %v1419 = vpop.permute.xlu0 %1418
        %1422 = vset.pattern.permute.xlu0 0
        %1423 = vperm.xlu0 %1422, %v388
        %v1424 = vpop.permute.xlu0 %1423
        %1427 = vset.pattern.permute.xlu0 0
        %1428 = vperm.xlu0 %1427, %v389
        %v1429 = vpop.permute.xlu0 %1428
        %1432 = vset.pattern.permute.xlu0 0
        %1433 = vperm.xlu0 %1432, %v390
        %v1434 = vpop.permute.xlu0 %1433
        %1437 = vset.pattern.permute.xlu0 0
        %1438 = vperm.xlu0 %1437, %v391
        %v1439 = vpop.permute.xlu0 %1438
        %1442 = vset.pattern.permute.xlu0 0
        %1443 = vperm.xlu0 %1442, %v392
        %v1444 = vpop.permute.xlu0 %1443
        %1447 = vset.pattern.permute.xlu0 0
        %1448 = vperm.xlu0 %1447, %v393
        %v1449 = vpop.permute.xlu0 %1448
        %1452 = vset.pattern.permute.xlu0 0
        %1453 = vperm.xlu0 %1452, %v394
        %v1454 = vpop.permute.xlu0 %1453
        %1457 = vset.pattern.permute.xlu0 0
        %1458 = vperm.xlu0 %1457, %v395
        %v1459 = vpop.permute.xlu0 %1458
        %1462 = vset.pattern.permute.xlu0 0
        %1463 = vperm.xlu0 %1462, %v396
        %v1464 = vpop.permute.xlu0 %1463
        %1467 = vset.pattern.permute.xlu0 0
        %1468 = vperm.xlu0 %1467, %v397
        %v1469 = vpop.permute.xlu0 %1468
        %1472 = vset.pattern.permute.xlu0 0
        %1473 = vperm.xlu0 %1472, %v398
        %v1474 = vpop.permute.xlu0 %1473
        %1477 = vset.pattern.permute.xlu0 0
        %1478 = vperm.xlu0 %1477, %v399
        %v1479 = vpop.permute.xlu0 %1478
        %1482 = vset.pattern.permute.xlu0 0
        %1483 = vperm.xlu0 %1482, %v400
        %v1484 = vpop.permute.xlu0 %1483
        %v1486 = vadd.f32 %v1150, %v1249
        %v1487 = vadd.f32 %v1151, %v1249
        %v1488 = vadd.f32 %v1152, %v1254
        %v1489 = vadd.f32 %v1153, %v1254
        %v1490 = vadd.f32 %v1154, %v1259
        %v1491 = vadd.f32 %v1155, %v1259
        %v1492 = vadd.f32 %v1156, %v1264
        %v1493 = vadd.f32 %v1157, %v1264
        %v1494 = vadd.f32 %v1158, %v1269
        %v1495 = vadd.f32 %v1159, %v1269
        %v1496 = vadd.f32 %v1160, %v1274
        %v1497 = vadd.f32 %v1161, %v1274
        %v1498 = vadd.f32 %v1162, %v1279
        %v1499 = vadd.f32 %v1163, %v1279
        %v1500 = vadd.f32 %v1164, %v1284
        %v1501 = vadd.f32 %v1165, %v1284
        %v1502 = vadd.f32 %v1166, %v1289
        %v1503 = vadd.f32 %v1167, %v1289
        %v1504 = vadd.f32 %v1168, %v1294
        %v1505 = vadd.f32 %v1169, %v1294
        %v1506 = vadd.f32 %v1170, %v1299
        %v1507 = vadd.f32 %v1171, %v1299
        %v1508 = vadd.f32 %v1172, %v1304
        %v1509 = vadd.f32 %v1173, %v1304
        %v1510 = vadd.f32 %v1174, %v1309
        %v1511 = vadd.f32 %v1175, %v1309
        %v1512 = vadd.f32 %v1176, %v1314
        %v1513 = vadd.f32 %v1177, %v1314
        %v1514 = vadd.f32 %v1178, %v1319
        %v1515 = vadd.f32 %v1179, %v1319
        %v1516 = vadd.f32 %v1180, %v1324
        %v1517 = vadd.f32 %v1181, %v1324
        %v1518 = vadd.f32 %v1182, %v1329
        %v1519 = vadd.f32 %v1183, %v1329
        %v1520 = vadd.f32 %v1184, %v1334
        %v1521 = vadd.f32 %v1185, %v1334
        %v1522 = vadd.f32 %v1186, %v1339
        %v1523 = vadd.f32 %v1187, %v1339
        %v1524 = vadd.f32 %v1188, %v1344
        %v1525 = vadd.f32 %v1189, %v1344
        %v1526 = vadd.f32 %v1190, %v1349
        %v1527 = vadd.f32 %v1191, %v1349
        %v1528 = vadd.f32 %v1192, %v1354
        %v1529 = vadd.f32 %v1193, %v1354
        %v1530 = vadd.f32 %v1194, %v1359
        %v1531 = vadd.f32 %v1195, %v1359
        %v1532 = vadd.f32 %v1196, %v1364
        %v1533 = vadd.f32 %v1197, %v1364
        %v1534 = vadd.f32 %v1198, %v1369
        %v1535 = vadd.f32 %v1199, %v1369
        %v1536 = vadd.f32 %v1200, %v1374
        %v1537 = vadd.f32 %v1201, %v1374
        %v1538 = vadd.f32 %v1202, %v1379
        %v1539 = vadd.f32 %v1203, %v1379
        %v1540 = vadd.f32 %v1204, %v1384
        %v1541 = vadd.f32 %v1205, %v1384
        %v1542 = vadd.f32 %v1206, %v1389
        %v1543 = vadd.f32 %v1207, %v1389
        %v1544 = vadd.f32 %v1208, %v1394
        %v1545 = vadd.f32 %v1209, %v1394
        %v1546 = vadd.f32 %v1210, %v1399
        %v1547 = vadd.f32 %v1211, %v1399
        %v1548 = vadd.f32 %v1212, %v1404
        %v1549 = vadd.f32 %v1213, %v1404
        %v1550 = vadd.f32 %v1214, %v1409
        %v1551 = vadd.f32 %v1215, %v1409
        %v1552 = vadd.f32 %v1216, %v1414
        %v1553 = vadd.f32 %v1217, %v1414
        %v1554 = vadd.f32 %v1218, %v1419
        %v1555 = vadd.f32 %v1219, %v1419
        %v1556 = vadd.f32 %v1220, %v1424
        %v1557 = vadd.f32 %v1221, %v1424
        %v1558 = vadd.f32 %v1222, %v1429
        %v1559 = vadd.f32 %v1223, %v1429
        %v1560 = vadd.f32 %v1224, %v1434
        %v1561 = vadd.f32 %v1225, %v1434
        %v1562 = vadd.f32 %v1226, %v1439
        %v1563 = vadd.f32 %v1227, %v1439
        %v1564 = vadd.f32 %v1228, %v1444
        %v1565 = vadd.f32 %v1229, %v1444
        %v1566 = vadd.f32 %v1230, %v1449
        %v1567 = vadd.f32 %v1231, %v1449
        %v1568 = vadd.f32 %v1232, %v1454
        %v1569 = vadd.f32 %v1233, %v1454
        %v1570 = vadd.f32 %v1234, %v1459
        %v1571 = vadd.f32 %v1235, %v1459
        %v1572 = vadd.f32 %v1236, %v1464
        %v1573 = vadd.f32 %v1237, %v1464
        %v1574 = vadd.f32 %v1238, %v1469
        %v1575 = vadd.f32 %v1239, %v1469
        %v1576 = vadd.f32 %v1240, %v1474
        %v1577 = vadd.f32 %v1241, %v1474
        %v1578 = vadd.f32 %v1242, %v1479
        %v1579 = vadd.f32 %v1243, %v1479
        %v1580 = vadd.f32 %v1244, %v1484
        %v1581 = vadd.f32 %v1245, %v1484
        %1582 = vst [vmem:[%s206] sm:$0xff] %v1486
        %1583 = vst [vmem:[%s206 + $0x8] sm:$0xff] %v1487
        %1584 = vst [vmem:[%s206 + $0x10] sm:$0xff] %v1488
        %1585 = vst [vmem:[%s206 + $0x18] sm:$0xff] %v1489
        %1586 = vst [vmem:[%s206 + $0x20] sm:$0xff] %v1490
        %1587 = vst [vmem:[%s206 + $0x28] sm:$0xff] %v1491
        %1588 = vst [vmem:[%s206 + $0x30] sm:$0xff] %v1492
        %1589 = vst [vmem:[%s206 + $0x38] sm:$0xff] %v1493
        %1590 = vst [vmem:[%s206 + $0x40] sm:$0xff] %v1494
        %1591 = vst [vmem:[%s206 + $0x48] sm:$0xff] %v1495
        %1592 = vst [vmem:[%s206 + $0x50] sm:$0xff] %v1496
        %1593 = vst [vmem:[%s206 + $0x58] sm:$0xff] %v1497
        %1594 = vst [vmem:[%s206 + $0x60] sm:$0xff] %v1498
        %1595 = vst [vmem:[%s206 + $0x68] sm:$0xff] %v1499
        %1596 = vst [vmem:[%s206 + $0x70] sm:$0xff] %v1500
        %1597 = vst [vmem:[%s206 + $0x78] sm:$0xff] %v1501
        %1598 = vst [vmem:[%s206 + $0x80] sm:$0xff] %v1502
        %1599 = vst [vmem:[%s206 + $0x88] sm:$0xff] %v1503
        %1600 = vst [vmem:[%s206 + $0x90] sm:$0xff] %v1504
        %1601 = vst [vmem:[%s206 + $0x98] sm:$0xff] %v1505
        %1602 = vst [vmem:[%s206 + $0xa0] sm:$0xff] %v1506
        %1603 = vst [vmem:[%s206 + $0xa8] sm:$0xff] %v1507
        %1604 = vst [vmem:[%s206 + $0xb0] sm:$0xff] %v1508
        %1605 = vst [vmem:[%s206 + $0xb8] sm:$0xff] %v1509
        %1606 = vst [vmem:[%s206 + $0xc0] sm:$0xff] %v1510
        %1607 = vst [vmem:[%s206 + $0xc8] sm:$0xff] %v1511
        %1608 = vst [vmem:[%s206 + $0xd0] sm:$0xff] %v1512
        %1609 = vst [vmem:[%s206 + $0xd8] sm:$0xff] %v1513
        %1610 = vst [vmem:[%s206 + $0xe0] sm:$0xff] %v1514
        %1611 = vst [vmem:[%s206 + $0xe8] sm:$0xff] %v1515
        %1612 = vst [vmem:[%s206 + $0xf0] sm:$0xff] %v1516
        %1613 = vst [vmem:[%s206 + $0xf8] sm:$0xff] %v1517
        %1614 = vst [vmem:[%s206 + $0x100] sm:$0xff] %v1518
        %1615 = vst [vmem:[%s206 + $0x108] sm:$0xff] %v1519
        %1616 = vst [vmem:[%s206 + $0x110] sm:$0xff] %v1520
        %1617 = vst [vmem:[%s206 + $0x118] sm:$0xff] %v1521
        %1618 = vst [vmem:[%s206 + $0x120] sm:$0xff] %v1522
        %1619 = vst [vmem:[%s206 + $0x128] sm:$0xff] %v1523
        %1620 = vst [vmem:[%s206 + $0x130] sm:$0xff] %v1524
        %1621 = vst [vmem:[%s206 + $0x138] sm:$0xff] %v1525
        %1622 = vst [vmem:[%s206 + $0x140] sm:$0xff] %v1526
        %1623 = vst [vmem:[%s206 + $0x148] sm:$0xff] %v1527
        %1624 = vst [vmem:[%s206 + $0x150] sm:$0xff] %v1528
        %1625 = vst [vmem:[%s206 + $0x158] sm:$0xff] %v1529
        %1626 = vst [vmem:[%s206 + $0x160] sm:$0xff] %v1530
        %1627 = vst [vmem:[%s206 + $0x168] sm:$0xff] %v1531
        %1628 = vst [vmem:[%s206 + $0x170] sm:$0xff] %v1532
        %1629 = vst [vmem:[%s206 + $0x178] sm:$0xff] %v1533
        %1630 = vst [vmem:[%s206 + $0x180] sm:$0xff] %v1534
        %1631 = vst [vmem:[%s206 + $0x188] sm:$0xff] %v1535
        %1632 = vst [vmem:[%s206 + $0x190] sm:$0xff] %v1536
        %1633 = vst [vmem:[%s206 + $0x198] sm:$0xff] %v1537
        %1634 = vst [vmem:[%s206 + $0x1a0] sm:$0xff] %v1538
        %1635 = vst [vmem:[%s206 + $0x1a8] sm:$0xff] %v1539
        %1636 = vst [vmem:[%s206 + $0x1b0] sm:$0xff] %v1540
        %1637 = vst [vmem:[%s206 + $0x1b8] sm:$0xff] %v1541
        %1638 = vst [vmem:[%s206 + $0x1c0] sm:$0xff] %v1542
        %1639 = vst [vmem:[%s206 + $0x1c8] sm:$0xff] %v1543
        %1640 = vst [vmem:[%s206 + $0x1d0] sm:$0xff] %v1544
        %1641 = vst [vmem:[%s206 + $0x1d8] sm:$0xff] %v1545
        %1642 = vst [vmem:[%s206 + $0x1e0] sm:$0xff] %v1546
        %1643 = vst [vmem:[%s206 + $0x1e8] sm:$0xff] %v1547
        %1644 = vst [vmem:[%s206 + $0x1f0] sm:$0xff] %v1548
        %1645 = vst [vmem:[%s206 + $0x1f8] sm:$0xff] %v1549
        %1646 = vst [vmem:[%s206 + $0x200] sm:$0xff] %v1550
        %1647 = vst [vmem:[%s206 + $0x208] sm:$0xff] %v1551
        %1648 = vst [vmem:[%s206 + $0x210] sm:$0xff] %v1552
        %1649 = vst [vmem:[%s206 + $0x218] sm:$0xff] %v1553
        %1650 = vst [vmem:[%s206 + $0x220] sm:$0xff] %v1554
        %1651 = vst [vmem:[%s206 + $0x228] sm:$0xff] %v1555
        %1652 = vst [vmem:[%s206 + $0x230] sm:$0xff] %v1556
        %1653 = vst [vmem:[%s206 + $0x238] sm:$0xff] %v1557
        %1654 = vst [vmem:[%s206 + $0x240] sm:$0xff] %v1558
        %1655 = vst [vmem:[%s206 + $0x248] sm:$0xff] %v1559
        %1656 = vst [vmem:[%s206 + $0x250] sm:$0xff] %v1560
        %1657 = vst [vmem:[%s206 + $0x258] sm:$0xff] %v1561
        %1658 = vst [vmem:[%s206 + $0x260] sm:$0xff] %v1562
        %1659 = vst [vmem:[%s206 + $0x268] sm:$0xff] %v1563
        %1660 = vst [vmem:[%s206 + $0x270] sm:$0xff] %v1564
        %1661 = vst [vmem:[%s206 + $0x278] sm:$0xff] %v1565
        %1662 = vst [vmem:[%s206 + $0x280] sm:$0xff] %v1566
        %1663 = vst [vmem:[%s206 + $0x288] sm:$0xff] %v1567
        %1664 = vst [vmem:[%s206 + $0x290] sm:$0xff] %v1568
        %1665 = vst [vmem:[%s206 + $0x298] sm:$0xff] %v1569
        %1666 = vst [vmem:[%s206 + $0x2a0] sm:$0xff] %v1570
        %1667 = vst [vmem:[%s206 + $0x2a8] sm:$0xff] %v1571
        %1668 = vst [vmem:[%s206 + $0x2b0] sm:$0xff] %v1572
        %1669 = vst [vmem:[%s206 + $0x2b8] sm:$0xff] %v1573
        %1670 = vst [vmem:[%s206 + $0x2c0] sm:$0xff] %v1574
        %1671 = vst [vmem:[%s206 + $0x2c8] sm:$0xff] %v1575
        %1672 = vst [vmem:[%s206 + $0x2d0] sm:$0xff] %v1576
        %1673 = vst [vmem:[%s206 + $0x2d8] sm:$0xff] %v1577
        %1674 = vst [vmem:[%s206 + $0x2e0] sm:$0xff] %v1578
        %1675 = vst [vmem:[%s206 + $0x2e8] sm:$0xff] %v1579
        %1676 = vst [vmem:[%s206 + $0x2f0] sm:$0xff] %v1580
        %1677 = vst [vmem:[%s206 + $0x2f8] sm:$0xff] %v1581
        %s1678 = sand.u32 %s112, 1
        %s1679 = scalar_lea.sflag [#allocation4], %s1678
        %s1680 = sand.u32 %s112, 1
        %s1681 = smul.addr %s1680, 768
        %s1682 = scalar_lea.vmem [#allocation5], %s1681
        // Predicated region
        $region37: #{tpu_custom_call.1} parent=31 // pred_check
          %p1683 = pneg %p122
        $region38: #{tpu_custom_call.1} parent=31 // pred_check_branch
          %1685 = sbr.rel (%p1683) target = $region40
        $region39: #{tpu_custom_call.1} parent=31 // pred_region
          %s1686 = smul.u32 2, %s25
          %s1688 = ssub.s32 12288, 12288
          %1689 = vsyncadd %s1679, %s1688
          %s1690 = smul.addr %s24, 96
          %s1691 = sadd.s32 %s1686, %s1690
          %s1692 = smul.addr %s1691, 128
          %s1693 = scalar_lea.hbm %s3, %s1692
          %s1694 = sshll.u32 %s1682, 4
          %s1695 = int_to_ptr.vmem [resolvable:$true] %s1694
          %1700 = dma.vmem_to_hbm [thread:$0]  %s1695, 12288, %s1693, %s1679, 256, 256, 16
        $region40: #{tpu_custom_call.1} parent=31 // pred_fallthru
          _
      $region32: #{tpu_custom_call.1} parent=5 // pred_fallthru
        _
      %p1701 = scmp.le.s32.totalorder 2, %s15
      // Predicated region
      $region41: #{tpu_custom_call.1} parent=5 // pred_check
        %p1702 = pneg %p1701
      $region42: #{tpu_custom_call.1} parent=5 // pred_check_branch
        %1704 = sbr.rel (%p1702) target = $region44
      $region43: #{tpu_custom_call.1} parent=5 // pred_region
        %s1705 = ssub.s32 %s15, 2
        // Predicated region
        $region45: #{tpu_custom_call.1} parent=43 // pred_check
          %p1706 = pneg %p128
        $region46: #{tpu_custom_call.1} parent=43 // pred_check_branch
          %1708 = sbr.rel (%p1706) target = $region48
        $region47: #{tpu_custom_call.1} parent=43 // pred_region
          %s1709 = sand.u32 %s113, 1
          %s1710 = scalar_lea.sflag [#allocation4], %s1709
          %s1711 = sand.u32 %s113, 1
          %s1712 = smul.addr %s1711, 768
          %s1713 = scalar_lea.vmem [#allocation5], %s1712
          %1714 = dma.done %s1710, 12288
        $region48: #{tpu_custom_call.1} parent=43 // pred_fallthru
          _
      $region44: #{tpu_custom_call.1} parent=5 // pred_fallthru
        _
    $region6: #{tpu_custom_call.1} parent=1 // loop_footer
      %s19 = sadd.s32 1, %s15
    $region7: #{tpu_custom_call.1} parent=1 // loop_footer_branch
      %14 = sbr.rel target = $region3
    $region8: #{tpu_custom_call.1} parent=1 // loop_exit
      _
    %1715 = vsyncpa [#allocation3], 1
    %s1716 = scalar_lea.sflag [#allocation3], 1
    %1717 = vsyncpa %s1716, 1
    %1718 = vsyncpa [#allocation4], 1
    %s1719 = scalar_lea.sflag [#allocation4], 1
    %1720 = vsyncpa %s1719, 1

</llo_original>
